<compile_context>
chip_gen: v6e
topology: v6e:2x2x1
jax: 0.10.0
libtpu: 0.0.40
codegen_flags: <defaults>
</compile_context>

<pallas_src>
import functools

import jax
import jax.numpy as jnp
import numpy as np
from jax.experimental import pallas as pl
from jax.experimental.pallas import tpu as pltpu

_SUBLANE = 8  # sublane tile height


def _lstm_fc_kernel(xflat_ref,
                    wih0_ref, whh0_ref, b0_ref,
                    w1s_ref, b1_ref,
                    wfc_ref, bfc_ref,
                    out_ref,
                    *, batch, seq_len, hidden_size):
    """Whole forward pass in one grid-less invocation (all operands in VMEM).

    batch here is the PADDED batch (multiple of 8 sublanes).
    """
    B, T, H = batch, seq_len, hidden_size

    # Recurrent weights loaded once into vregs.
    whh0_v = whh0_ref[...]          # (H, 4H)
    w1s_v = w1s_ref[...]            # (2H, 4H)  == vstack(W_ih1^T, W_hh1^T)

    # --- Hoisted layer-0 input projection: one (T*B, I) x (I, 4H) matmul,
    #     bias folded in (single broadcast, outside the loop).  Row t*B + b
    #     of xflat corresponds to (batch b, timestep t).
    pre0 = (jnp.dot(xflat_ref[...], wih0_ref[...],
                    preferred_element_type=jnp.float32)
            + jnp.broadcast_to(b0_ref[...], (T * B, 4 * H)))      # (T*B, 4H)

    # Hoisted layer-1 bias broadcast (JAX does not CSE broadcast_in_dim).
    b1_b = jnp.broadcast_to(b1_ref[...], (B, 4 * H))

    # Recurrent state lives purely in vregs.
    h0 = jnp.zeros((B, H), jnp.float32)
    c0 = jnp.zeros((B, H), jnp.float32)
    h1 = jnp.zeros((B, H), jnp.float32)
    c1 = jnp.zeros((B, H), jnp.float32)

    def cell(gates, c_prev):
        # Full-tile EUP ops, then per-gate slices (PyTorch order i, f, g, o).
        sig = jax.nn.sigmoid(gates)
        th = jnp.tanh(gates)
        i_g = sig[:, 0 * H:1 * H]
        f_g = sig[:, 1 * H:2 * H]
        g_g = th[:, 2 * H:3 * H]
        o_g = sig[:, 3 * H:4 * H]
        c_new = f_g * c_prev + i_g * g_g
        h_new = o_g * jnp.tanh(c_new)
        return h_new, c_new

    h1_steps = []
    for t in range(T):  # static unroll; layer-0 and layer-1 chains interleave
        # Layer 0: only the recurrent matmul sits on the serial path.
        # With B padded to 8, this slice is an aligned sublane-tile slice.
        g0 = pre0[t * B:(t + 1) * B, :] + jnp.dot(
            h0, whh0_v, preferred_element_type=jnp.float32)
        h0, c0 = cell(g0, c0)

        # Layer 1: single fused matmul over the lane-concatenated [h0 | h1]
        # (one MXU round-trip per step instead of two).
        h01 = jnp.concatenate([h0, h1], axis=1)                    # (B, 2H)
        g1 = b1_b + jnp.dot(h01, w1s_v, preferred_element_type=jnp.float32)
        h1, c1 = cell(g1, c1)
        h1_steps.append(h1)

    # FC head: one 2D matmul over all timesteps, single output store.
    # Each h1 is a full (8, H) sublane tile, so this concat is aligned.
    hcat = jnp.concatenate(h1_steps, axis=0)                       # (T*B, H)
    fc = (jnp.dot(hcat, wfc_ref[...], preferred_element_type=jnp.float32)
          + jnp.broadcast_to(bfc_ref[...], (T * B, out_ref.shape[-1])))
    out_ref[...] = fc.astype(out_ref.dtype)


def lstm_fc_forward(x, params, hidden_size, output_size):
    B, T, input_size = x.shape
    H = hidden_size
    (wih0, whh0, b0, w1s, b1, wfc, bfc) = params

    # --- Wrapper-side layout plumbing ---
    # Pad batch up to the sublane tile so every per-step slice in the kernel is
    # an aligned (8, lanes) tile.  Padded rows are zero inputs; their h/c
    # evolve independently and are sliced off before returning.
    Bp = max(_SUBLANE, ((B + _SUBLANE - 1) // _SUBLANE) * _SUBLANE)
    x_p = jnp.pad(x, ((0, Bp - B), (0, 0), (0, 0))) if Bp != B else x

    # Time-major flatten: row t*Bp + b == x_p[b, t, :].
    xflat = jnp.swapaxes(x_p, 0, 1).reshape(T * Bp, input_size)

    kernel = functools.partial(_lstm_fc_kernel, batch=Bp, seq_len=T,
                               hidden_size=H)
    vmem = pl.BlockSpec(memory_space=pltpu.MemorySpace.VMEM)

    # Grid-less: total footprint is a few KB, far below VMEM on v5e/v6e/v7x.
    # (For a large batch, shard batch across TensorCores with a "parallel"
    #  grid on v7x; not worth it at Bp=8.)
    out_flat = pl.pallas_call(
        kernel,
        out_shape=jax.ShapeDtypeStruct((T * Bp, output_size), jnp.float32),
        in_specs=[vmem] * 8,
        out_specs=vmem,
    )(xflat, wih0, whh0, b0, w1s, b1, wfc, bfc)

    # Back to batch_first (B, T, output_size); drop the padded batch rows.
    out = jnp.swapaxes(out_flat.reshape(T, Bp, output_size), 0, 1)
    return out[:B]


def make_params(key, input_size, hidden_size, output_size):
    """Deterministic init mimicking PyTorch's U(-1/sqrt(H), 1/sqrt(H))."""
    H = hidden_size
    k = 1.0 / np.sqrt(H)
    keys = jax.random.split(key, 12)

    def u(kk, shape):
        return jax.random.uniform(kk, shape, jnp.float32, minval=-k, maxval=k)

    # layer 0
    w_ih0 = u(keys[0], (4 * H, input_size))
    w_hh0 = u(keys[1], (4 * H, H))
    b_ih0 = u(keys[2], (4 * H,))
    b_hh0 = u(keys[3], (4 * H,))
    # layer 1
    w_ih1 = u(keys[4], (4 * H, H))
    w_hh1 = u(keys[5], (4 * H, H))
    b_ih1 = u(keys[6], (4 * H,))
    b_hh1 = u(keys[7], (4 * H,))
    # fc
    kf = 1.0 / np.sqrt(H)
    w_fc = jax.random.uniform(keys[8], (output_size, H), jnp.float32, -kf, kf)
    b_fc = jax.random.uniform(keys[9], (output_size,), jnp.float32, -kf, kf)

    # Transpose / combine for the kernel.  Layer-1 weights are pre-stacked so
    # the kernel does a single fused matmul: [h0 | h1] @ vstack(Wih1^T, Whh1^T).
    w1_stacked = jnp.concatenate([w_ih1.T, w_hh1.T], axis=0)       # (2H, 4H)
    params = (
        w_ih0.T, w_hh0.T, (b_ih0 + b_hh0)[None, :],
        w1_stacked, (b_ih1 + b_hh1)[None, :],
        w_fc.T, b_fc[None, :],
    )
    return params


def reference_forward(x, params, hidden_size):
    """Pure-JAX reference (same math as the PyTorch module in eval mode)."""
    H = hidden_size
    (wih0, whh0, b0, w1s, b1, wfc, bfc) = params
    wih1, whh1 = w1s[:H], w1s[H:]
    B, T, _ = x.shape

    def run_layer(seq, wih, whh, b):
        h = jnp.zeros((B, H), jnp.float32)
        c = jnp.zeros((B, H), jnp.float32)
        outs = []
        for t in range(T):
            gates = seq[:, t, :] @ wih + h @ whh + b
            i = jax.nn.sigmoid(gates[:, 0 * H:1 * H])
            f = jax.nn.sigmoid(gates[:, 1 * H:2 * H])
            g = jnp.tanh(gates[:, 2 * H:3 * H])
            o = jax.nn.sigmoid(gates[:, 3 * H:4 * H])
            c = f * c + i * g
            h = o * jnp.tanh(c)
            outs.append(h)
        return jnp.stack(outs, axis=1)

    h1 = run_layer(x, wih0, whh0, b0)
    h2 = run_layer(h1, wih1, whh1, b1)
    return jnp.einsum('bth,ho->bto', h2, wfc) + bfc


if __name__ == "__main__":
    input_size, hidden_size, output_size = 5, 16, 3
    B, T = 2, 8

    key = jax.random.PRNGKey(0)
    kx, kp = jax.random.split(key)
    x = jax.random.normal(kx, (B, T, input_size), dtype=jnp.float32)
    params = make_params(kp, input_size, hidden_size, output_size)

    out = lstm_fc_forward(x, params, hidden_size, output_size)
    out = jax.block_until_ready(out)

    ref = jax.block_until_ready(reference_forward(x, params, hidden_size))
    assert out.shape == (B, T, output_size)
    np.testing.assert_allclose(np.asarray(out), np.asarray(ref),
                               rtol=1e-4, atol=1e-4)
    print("KERNEL_OK")
</pallas_src>

<mosaic_0001>
module attributes {stable_mosaic.version = 11 : i64} {
  func.func @_lstm_fc_kernel(%arg0: memref<64x5xf32, #tpu.memory_space<vmem>>, %arg1: memref<5x64xf32, #tpu.memory_space<vmem>>, %arg2: memref<16x64xf32, #tpu.memory_space<vmem>>, %arg3: memref<1x64xf32, #tpu.memory_space<vmem>>, %arg4: memref<32x64xf32, #tpu.memory_space<vmem>>, %arg5: memref<1x64xf32, #tpu.memory_space<vmem>>, %arg6: memref<16x3xf32, #tpu.memory_space<vmem>>, %arg7: memref<1x3xf32, #tpu.memory_space<vmem>>, %arg8: memref<64x3xf32, #tpu.memory_space<vmem>>) attributes {dimension_semantics = [], scalar_prefetch = 0 : i64, scratch_operands = 0 : i64, tpu.core_type = #tpu.core_type<tc>} {
    %c0 = arith.constant 0 : index
    %c0_0 = arith.constant 0 : index
    %0 = vector.load %arg2[%c0, %c0_0] : memref<16x64xf32, #tpu.memory_space<vmem>>, vector<16x64xf32>
    %c0_1 = arith.constant 0 : index
    %c0_2 = arith.constant 0 : index
    %1 = vector.load %arg4[%c0_1, %c0_2] : memref<32x64xf32, #tpu.memory_space<vmem>>, vector<32x64xf32>
    %c0_3 = arith.constant 0 : index
    %c0_4 = arith.constant 0 : index
    %2 = vector.load %arg0[%c0_3, %c0_4] : memref<64x5xf32, #tpu.memory_space<vmem>>, vector<64x5xf32>
    %c0_5 = arith.constant 0 : index
    %c0_6 = arith.constant 0 : index
    %3 = vector.load %arg1[%c0_5, %c0_6] : memref<5x64xf32, #tpu.memory_space<vmem>>, vector<5x64xf32>
    %cst = arith.constant dense<0.000000e+00> : vector<64x64xf32>
    %4 = tpu.matmul %2, %3, %cst {dimension_numbers = #tpu.dot_dimension_numbers<[1], [0], [0], [1], [0, 0, 1, 1], [], []>} : vector<64x5xf32>, vector<5x64xf32>, vector<64x64xf32> -> vector<64x64xf32>
    %c0_7 = arith.constant 0 : index
    %c0_8 = arith.constant 0 : index
    %5 = vector.load %arg3[%c0_7, %c0_8] : memref<1x64xf32, #tpu.memory_space<vmem>>, vector<1x64xf32>
    %6 = vector.shape_cast %5 : vector<1x64xf32> to vector<1x64xf32>
    %7 = vector.broadcast %6 : vector<1x64xf32> to vector<64x64xf32>
    %8 = arith.addf %4, %7 : vector<64x64xf32>
    %c0_9 = arith.constant 0 : index
    %c0_10 = arith.constant 0 : index
    %9 = vector.load %arg5[%c0_9, %c0_10] : memref<1x64xf32, #tpu.memory_space<vmem>>, vector<1x64xf32>
    %10 = vector.shape_cast %9 : vector<1x64xf32> to vector<1x64xf32>
    %11 = vector.broadcast %10 : vector<1x64xf32> to vector<8x64xf32>
    %cst_11 = arith.constant 0.000000e+00 : f32
    %12 = vector.broadcast %cst_11 : f32 to vector<8x16xf32>
    %cst_12 = arith.constant 0.000000e+00 : f32
    %13 = vector.broadcast %cst_12 : f32 to vector<8x16xf32>
    %cst_13 = arith.constant 0.000000e+00 : f32
    %14 = vector.broadcast %cst_13 : f32 to vector<8x16xf32>
    %cst_14 = arith.constant 0.000000e+00 : f32
    %15 = vector.broadcast %cst_14 : f32 to vector<8x16xf32>
    %16 = vector.extract_strided_slice %8 {offsets = [0, 0], sizes = [8, 64], strides = [1, 1]} : vector<64x64xf32> to vector<8x64xf32>
    %cst_15 = arith.constant dense<0.000000e+00> : vector<8x64xf32>
    %17 = tpu.matmul %12, %0, %cst_15 {dimension_numbers = #tpu.dot_dimension_numbers<[1], [0], [0], [1], [0, 0, 1, 1], [], []>} : vector<8x16xf32>, vector<16x64xf32>, vector<8x64xf32> -> vector<8x64xf32>
    %18 = arith.addf %16, %17 : vector<8x64xf32>
    %19 = arith.negf %18 : vector<8x64xf32>
    %20 = math.exp %19 : vector<8x64xf32>
    %cst_16 = arith.constant 1.000000e+00 : f32
    %21 = vector.broadcast %cst_16 : f32 to vector<8x64xf32>
    %22 = arith.addf %21, %20 : vector<8x64xf32>
    %23 = arith.divf %21, %22 : vector<8x64xf32>
    %24 = math.tanh %18 : vector<8x64xf32>
    %25 = vector.extract_strided_slice %23 {offsets = [0, 0], sizes = [8, 16], strides = [1, 1]} : vector<8x64xf32> to vector<8x16xf32>
    %26 = vector.extract_strided_slice %23 {offsets = [0, 16], sizes = [8, 16], strides = [1, 1]} : vector<8x64xf32> to vector<8x16xf32>
    %27 = vector.extract_strided_slice %24 {offsets = [0, 32], sizes = [8, 16], strides = [1, 1]} : vector<8x64xf32> to vector<8x16xf32>
    %28 = vector.extract_strided_slice %23 {offsets = [0, 48], sizes = [8, 16], strides = [1, 1]} : vector<8x64xf32> to vector<8x16xf32>
    %29 = arith.mulf %26, %13 : vector<8x16xf32>
    %30 = arith.mulf %25, %27 : vector<8x16xf32>
    %31 = arith.addf %29, %30 : vector<8x16xf32>
    %32 = math.tanh %31 : vector<8x16xf32>
    %33 = arith.mulf %28, %32 : vector<8x16xf32>
    %34 = tpu.concatenate %33, %14 in 1 : vector<8x16xf32>, vector<8x16xf32> -> vector<8x32xf32>
    %cst_17 = arith.constant dense<0.000000e+00> : vector<8x64xf32>
    %35 = tpu.matmul %34, %1, %cst_17 {dimension_numbers = #tpu.dot_dimension_numbers<[1], [0], [0], [1], [0, 0, 1, 1], [], []>} : vector<8x32xf32>, vector<32x64xf32>, vector<8x64xf32> -> vector<8x64xf32>
    %36 = arith.addf %11, %35 : vector<8x64xf32>
    %37 = arith.negf %36 : vector<8x64xf32>
    %38 = math.exp %37 : vector<8x64xf32>
    %cst_18 = arith.constant 1.000000e+00 : f32
    %39 = vector.broadcast %cst_18 : f32 to vector<8x64xf32>
    %40 = arith.addf %39, %38 : vector<8x64xf32>
    %41 = arith.divf %39, %40 : vector<8x64xf32>
    %42 = math.tanh %36 : vector<8x64xf32>
    %43 = vector.extract_strided_slice %41 {offsets = [0, 0], sizes = [8, 16], strides = [1, 1]} : vector<8x64xf32> to vector<8x16xf32>
    %44 = vector.extract_strided_slice %41 {offsets = [0, 16], sizes = [8, 16], strides = [1, 1]} : vector<8x64xf32> to vector<8x16xf32>
    %45 = vector.extract_strided_slice %42 {offsets = [0, 32], sizes = [8, 16], strides = [1, 1]} : vector<8x64xf32> to vector<8x16xf32>
    %46 = vector.extract_strided_slice %41 {offsets = [0, 48], sizes = [8, 16], strides = [1, 1]} : vector<8x64xf32> to vector<8x16xf32>
    %47 = arith.mulf %44, %15 : vector<8x16xf32>
    %48 = arith.mulf %43, %45 : vector<8x16xf32>
    %49 = arith.addf %47, %48 : vector<8x16xf32>
    %50 = math.tanh %49 : vector<8x16xf32>
    %51 = arith.mulf %46, %50 : vector<8x16xf32>
    %52 = vector.extract_strided_slice %8 {offsets = [8, 0], sizes = [8, 64], strides = [1, 1]} : vector<64x64xf32> to vector<8x64xf32>
    %cst_19 = arith.constant dense<0.000000e+00> : vector<8x64xf32>
    %53 = tpu.matmul %33, %0, %cst_19 {dimension_numbers = #tpu.dot_dimension_numbers<[1], [0], [0], [1], [0, 0, 1, 1], [], []>} : vector<8x16xf32>, vector<16x64xf32>, vector<8x64xf32> -> vector<8x64xf32>
    %54 = arith.addf %52, %53 : vector<8x64xf32>
    %55 = arith.negf %54 : vector<8x64xf32>
    %56 = math.exp %55 : vector<8x64xf32>
    %cst_20 = arith.constant 1.000000e+00 : f32
    %57 = vector.broadcast %cst_20 : f32 to vector<8x64xf32>
    %58 = arith.addf %57, %56 : vector<8x64xf32>
    %59 = arith.divf %57, %58 : vector<8x64xf32>
    %60 = math.tanh %54 : vector<8x64xf32>
    %61 = vector.extract_strided_slice %59 {offsets = [0, 0], sizes = [8, 16], strides = [1, 1]} : vector<8x64xf32> to vector<8x16xf32>
    %62 = vector.extract_strided_slice %59 {offsets = [0, 16], sizes = [8, 16], strides = [1, 1]} : vector<8x64xf32> to vector<8x16xf32>
    %63 = vector.extract_strided_slice %60 {offsets = [0, 32], sizes = [8, 16], strides = [1, 1]} : vector<8x64xf32> to vector<8x16xf32>
    %64 = vector.extract_strided_slice %59 {offsets = [0, 48], sizes = [8, 16], strides = [1, 1]} : vector<8x64xf32> to vector<8x16xf32>
    %65 = arith.mulf %62, %31 : vector<8x16xf32>
    %66 = arith.mulf %61, %63 : vector<8x16xf32>
    %67 = arith.addf %65, %66 : vector<8x16xf32>
    %68 = math.tanh %67 : vector<8x16xf32>
    %69 = arith.mulf %64, %68 : vector<8x16xf32>
    %70 = tpu.concatenate %69, %51 in 1 : vector<8x16xf32>, vector<8x16xf32> -> vector<8x32xf32>
    %cst_21 = arith.constant dense<0.000000e+00> : vector<8x64xf32>
    %71 = tpu.matmul %70, %1, %cst_21 {dimension_numbers = #tpu.dot_dimension_numbers<[1], [0], [0], [1], [0, 0, 1, 1], [], []>} : vector<8x32xf32>, vector<32x64xf32>, vector<8x64xf32> -> vector<8x64xf32>
    %72 = arith.addf %11, %71 : vector<8x64xf32>
    %73 = arith.negf %72 : vector<8x64xf32>
    %74 = math.exp %73 : vector<8x64xf32>
    %cst_22 = arith.constant 1.000000e+00 : f32
    %75 = vector.broadcast %cst_22 : f32 to vector<8x64xf32>
    %76 = arith.addf %75, %74 : vector<8x64xf32>
    %77 = arith.divf %75, %76 : vector<8x64xf32>
    %78 = math.tanh %72 : vector<8x64xf32>
    %79 = vector.extract_strided_slice %77 {offsets = [0, 0], sizes = [8, 16], strides = [1, 1]} : vector<8x64xf32> to vector<8x16xf32>
    %80 = vector.extract_strided_slice %77 {offsets = [0, 16], sizes = [8, 16], strides = [1, 1]} : vector<8x64xf32> to vector<8x16xf32>
    %81 = vector.extract_strided_slice %78 {offsets = [0, 32], sizes = [8, 16], strides = [1, 1]} : vector<8x64xf32> to vector<8x16xf32>
    %82 = vector.extract_strided_slice %77 {offsets = [0, 48], sizes = [8, 16], strides = [1, 1]} : vector<8x64xf32> to vector<8x16xf32>
    %83 = arith.mulf %80, %49 : vector<8x16xf32>
    %84 = arith.mulf %79, %81 : vector<8x16xf32>
    %85 = arith.addf %83, %84 : vector<8x16xf32>
    %86 = math.tanh %85 : vector<8x16xf32>
    %87 = arith.mulf %82, %86 : vector<8x16xf32>
    %88 = vector.extract_strided_slice %8 {offsets = [16, 0], sizes = [8, 64], strides = [1, 1]} : vector<64x64xf32> to vector<8x64xf32>
    %cst_23 = arith.constant dense<0.000000e+00> : vector<8x64xf32>
    %89 = tpu.matmul %69, %0, %cst_23 {dimension_numbers = #tpu.dot_dimension_numbers<[1], [0], [0], [1], [0, 0, 1, 1], [], []>} : vector<8x16xf32>, vector<16x64xf32>, vector<8x64xf32> -> vector<8x64xf32>
    %90 = arith.addf %88, %89 : vector<8x64xf32>
    %91 = arith.negf %90 : vector<8x64xf32>
    %92 = math.exp %91 : vector<8x64xf32>
    %cst_24 = arith.constant 1.000000e+00 : f32
    %93 = vector.broadcast %cst_24 : f32 to vector<8x64xf32>
    %94 = arith.addf %93, %92 : vector<8x64xf32>
    %95 = arith.divf %93, %94 : vector<8x64xf32>
    %96 = math.tanh %90 : vector<8x64xf32>
    %97 = vector.extract_strided_slice %95 {offsets = [0, 0], sizes = [8, 16], strides = [1, 1]} : vector<8x64xf32> to vector<8x16xf32>
    %98 = vector.extract_strided_slice %95 {offsets = [0, 16], sizes = [8, 16], strides = [1, 1]} : vector<8x64xf32> to vector<8x16xf32>
    %99 = vector.extract_strided_slice %96 {offsets = [0, 32], sizes = [8, 16], strides = [1, 1]} : vector<8x64xf32> to vector<8x16xf32>
    %100 = vector.extract_strided_slice %95 {offsets = [0, 48], sizes = [8, 16], strides = [1, 1]} : vector<8x64xf32> to vector<8x16xf32>
    %101 = arith.mulf %98, %67 : vector<8x16xf32>
    %102 = arith.mulf %97, %99 : vector<8x16xf32>
    %103 = arith.addf %101, %102 : vector<8x16xf32>
    %104 = math.tanh %103 : vector<8x16xf32>
    %105 = arith.mulf %100, %104 : vector<8x16xf32>
    %106 = tpu.concatenate %105, %87 in 1 : vector<8x16xf32>, vector<8x16xf32> -> vector<8x32xf32>
    %cst_25 = arith.constant dense<0.000000e+00> : vector<8x64xf32>
    %107 = tpu.matmul %106, %1, %cst_25 {dimension_numbers = #tpu.dot_dimension_numbers<[1], [0], [0], [1], [0, 0, 1, 1], [], []>} : vector<8x32xf32>, vector<32x64xf32>, vector<8x64xf32> -> vector<8x64xf32>
    %108 = arith.addf %11, %107 : vector<8x64xf32>
    %109 = arith.negf %108 : vector<8x64xf32>
    %110 = math.exp %109 : vector<8x64xf32>
    %cst_26 = arith.constant 1.000000e+00 : f32
    %111 = vector.broadcast %cst_26 : f32 to vector<8x64xf32>
    %112 = arith.addf %111, %110 : vector<8x64xf32>
    %113 = arith.divf %111, %112 : vector<8x64xf32>
    %114 = math.tanh %108 : vector<8x64xf32>
    %115 = vector.extract_strided_slice %113 {offsets = [0, 0], sizes = [8, 16], strides = [1, 1]} : vector<8x64xf32> to vector<8x16xf32>
    %116 = vector.extract_strided_slice %113 {offsets = [0, 16], sizes = [8, 16], strides = [1, 1]} : vector<8x64xf32> to vector<8x16xf32>
    %117 = vector.extract_strided_slice %114 {offsets = [0, 32], sizes = [8, 16], strides = [1, 1]} : vector<8x64xf32> to vector<8x16xf32>
    %118 = vector.extract_strided_slice %113 {offsets = [0, 48], sizes = [8, 16], strides = [1, 1]} : vector<8x64xf32> to vector<8x16xf32>
    %119 = arith.mulf %116, %85 : vector<8x16xf32>
    %120 = arith.mulf %115, %117 : vector<8x16xf32>
    %121 = arith.addf %119, %120 : vector<8x16xf32>
    %122 = math.tanh %121 : vector<8x16xf32>
    %123 = arith.mulf %118, %122 : vector<8x16xf32>
    %124 = vector.extract_strided_slice %8 {offsets = [24, 0], sizes = [8, 64], strides = [1, 1]} : vector<64x64xf32> to vector<8x64xf32>
    %cst_27 = arith.constant dense<0.000000e+00> : vector<8x64xf32>
    %125 = tpu.matmul %105, %0, %cst_27 {dimension_numbers = #tpu.dot_dimension_numbers<[1], [0], [0], [1], [0, 0, 1, 1], [], []>} : vector<8x16xf32>, vector<16x64xf32>, vector<8x64xf32> -> vector<8x64xf32>
    %126 = arith.addf %124, %125 : vector<8x64xf32>
    %127 = arith.negf %126 : vector<8x64xf32>
    %128 = math.exp %127 : vector<8x64xf32>
    %cst_28 = arith.constant 1.000000e+00 : f32
    %129 = vector.broadcast %cst_28 : f32 to vector<8x64xf32>
    %130 = arith.addf %129, %128 : vector<8x64xf32>
    %131 = arith.divf %129, %130 : vector<8x64xf32>
    %132 = math.tanh %126 : vector<8x64xf32>
    %133 = vector.extract_strided_slice %131 {offsets = [0, 0], sizes = [8, 16], strides = [1, 1]} : vector<8x64xf32> to vector<8x16xf32>
    %134 = vector.extract_strided_slice %131 {offsets = [0, 16], sizes = [8, 16], strides = [1, 1]} : vector<8x64xf32> to vector<8x16xf32>
    %135 = vector.extract_strided_slice %132 {offsets = [0, 32], sizes = [8, 16], strides = [1, 1]} : vector<8x64xf32> to vector<8x16xf32>
    %136 = vector.extract_strided_slice %131 {offsets = [0, 48], sizes = [8, 16], strides = [1, 1]} : vector<8x64xf32> to vector<8x16xf32>
    %137 = arith.mulf %134, %103 : vector<8x16xf32>
    %138 = arith.mulf %133, %135 : vector<8x16xf32>
    %139 = arith.addf %137, %138 : vector<8x16xf32>
    %140 = math.tanh %139 : vector<8x16xf32>
    %141 = arith.mulf %136, %140 : vector<8x16xf32>
    %142 = tpu.concatenate %141, %123 in 1 : vector<8x16xf32>, vector<8x16xf32> -> vector<8x32xf32>
    %cst_29 = arith.constant dense<0.000000e+00> : vector<8x64xf32>
    %143 = tpu.matmul %142, %1, %cst_29 {dimension_numbers = #tpu.dot_dimension_numbers<[1], [0], [0], [1], [0, 0, 1, 1], [], []>} : vector<8x32xf32>, vector<32x64xf32>, vector<8x64xf32> -> vector<8x64xf32>
    %144 = arith.addf %11, %143 : vector<8x64xf32>
    %145 = arith.negf %144 : vector<8x64xf32>
    %146 = math.exp %145 : vector<8x64xf32>
    %cst_30 = arith.constant 1.000000e+00 : f32
    %147 = vector.broadcast %cst_30 : f32 to vector<8x64xf32>
    %148 = arith.addf %147, %146 : vector<8x64xf32>
    %149 = arith.divf %147, %148 : vector<8x64xf32>
    %150 = math.tanh %144 : vector<8x64xf32>
    %151 = vector.extract_strided_slice %149 {offsets = [0, 0], sizes = [8, 16], strides = [1, 1]} : vector<8x64xf32> to vector<8x16xf32>
    %152 = vector.extract_strided_slice %149 {offsets = [0, 16], sizes = [8, 16], strides = [1, 1]} : vector<8x64xf32> to vector<8x16xf32>
    %153 = vector.extract_strided_slice %150 {offsets = [0, 32], sizes = [8, 16], strides = [1, 1]} : vector<8x64xf32> to vector<8x16xf32>
    %154 = vector.extract_strided_slice %149 {offsets = [0, 48], sizes = [8, 16], strides = [1, 1]} : vector<8x64xf32> to vector<8x16xf32>
    %155 = arith.mulf %152, %121 : vector<8x16xf32>
    %156 = arith.mulf %151, %153 : vector<8x16xf32>
    %157 = arith.addf %155, %156 : vector<8x16xf32>
    %158 = math.tanh %157 : vector<8x16xf32>
    %159 = arith.mulf %154, %158 : vector<8x16xf32>
    %160 = vector.extract_strided_slice %8 {offsets = [32, 0], sizes = [8, 64], strides = [1, 1]} : vector<64x64xf32> to vector<8x64xf32>
    %cst_31 = arith.constant dense<0.000000e+00> : vector<8x64xf32>
    %161 = tpu.matmul %141, %0, %cst_31 {dimension_numbers = #tpu.dot_dimension_numbers<[1], [0], [0], [1], [0, 0, 1, 1], [], []>} : vector<8x16xf32>, vector<16x64xf32>, vector<8x64xf32> -> vector<8x64xf32>
    %162 = arith.addf %160, %161 : vector<8x64xf32>
    %163 = arith.negf %162 : vector<8x64xf32>
    %164 = math.exp %163 : vector<8x64xf32>
    %cst_32 = arith.constant 1.000000e+00 : f32
    %165 = vector.broadcast %cst_32 : f32 to vector<8x64xf32>
    %166 = arith.addf %165, %164 : vector<8x64xf32>
    %167 = arith.divf %165, %166 : vector<8x64xf32>
    %168 = math.tanh %162 : vector<8x64xf32>
    %169 = vector.extract_strided_slice %167 {offsets = [0, 0], sizes = [8, 16], strides = [1, 1]} : vector<8x64xf32> to vector<8x16xf32>
    %170 = vector.extract_strided_slice %167 {offsets = [0, 16], sizes = [8, 16], strides = [1, 1]} : vector<8x64xf32> to vector<8x16xf32>
    %171 = vector.extract_strided_slice %168 {offsets = [0, 32], sizes = [8, 16], strides = [1, 1]} : vector<8x64xf32> to vector<8x16xf32>
    %172 = vector.extract_strided_slice %167 {offsets = [0, 48], sizes = [8, 16], strides = [1, 1]} : vector<8x64xf32> to vector<8x16xf32>
    %173 = arith.mulf %170, %139 : vector<8x16xf32>
    %174 = arith.mulf %169, %171 : vector<8x16xf32>
    %175 = arith.addf %173, %174 : vector<8x16xf32>
    %176 = math.tanh %175 : vector<8x16xf32>
    %177 = arith.mulf %172, %176 : vector<8x16xf32>
    %178 = tpu.concatenate %177, %159 in 1 : vector<8x16xf32>, vector<8x16xf32> -> vector<8x32xf32>
    %cst_33 = arith.constant dense<0.000000e+00> : vector<8x64xf32>
    %179 = tpu.matmul %178, %1, %cst_33 {dimension_numbers = #tpu.dot_dimension_numbers<[1], [0], [0], [1], [0, 0, 1, 1], [], []>} : vector<8x32xf32>, vector<32x64xf32>, vector<8x64xf32> -> vector<8x64xf32>
    %180 = arith.addf %11, %179 : vector<8x64xf32>
    %181 = arith.negf %180 : vector<8x64xf32>
    %182 = math.exp %181 : vector<8x64xf32>
    %cst_34 = arith.constant 1.000000e+00 : f32
    %183 = vector.broadcast %cst_34 : f32 to vector<8x64xf32>
    %184 = arith.addf %183, %182 : vector<8x64xf32>
    %185 = arith.divf %183, %184 : vector<8x64xf32>
    %186 = math.tanh %180 : vector<8x64xf32>
    %187 = vector.extract_strided_slice %185 {offsets = [0, 0], sizes = [8, 16], strides = [1, 1]} : vector<8x64xf32> to vector<8x16xf32>
    %188 = vector.extract_strided_slice %185 {offsets = [0, 16], sizes = [8, 16], strides = [1, 1]} : vector<8x64xf32> to vector<8x16xf32>
    %189 = vector.extract_strided_slice %186 {offsets = [0, 32], sizes = [8, 16], strides = [1, 1]} : vector<8x64xf32> to vector<8x16xf32>
    %190 = vector.extract_strided_slice %185 {offsets = [0, 48], sizes = [8, 16], strides = [1, 1]} : vector<8x64xf32> to vector<8x16xf32>
    %191 = arith.mulf %188, %157 : vector<8x16xf32>
    %192 = arith.mulf %187, %189 : vector<8x16xf32>
    %193 = arith.addf %191, %192 : vector<8x16xf32>
    %194 = math.tanh %193 : vector<8x16xf32>
    %195 = arith.mulf %190, %194 : vector<8x16xf32>
    %196 = vector.extract_strided_slice %8 {offsets = [40, 0], sizes = [8, 64], strides = [1, 1]} : vector<64x64xf32> to vector<8x64xf32>
    %cst_35 = arith.constant dense<0.000000e+00> : vector<8x64xf32>
    %197 = tpu.matmul %177, %0, %cst_35 {dimension_numbers = #tpu.dot_dimension_numbers<[1], [0], [0], [1], [0, 0, 1, 1], [], []>} : vector<8x16xf32>, vector<16x64xf32>, vector<8x64xf32> -> vector<8x64xf32>
    %198 = arith.addf %196, %197 : vector<8x64xf32>
    %199 = arith.negf %198 : vector<8x64xf32>
    %200 = math.exp %199 : vector<8x64xf32>
    %cst_36 = arith.constant 1.000000e+00 : f32
    %201 = vector.broadcast %cst_36 : f32 to vector<8x64xf32>
    %202 = arith.addf %201, %200 : vector<8x64xf32>
    %203 = arith.divf %201, %202 : vector<8x64xf32>
    %204 = math.tanh %198 : vector<8x64xf32>
    %205 = vector.extract_strided_slice %203 {offsets = [0, 0], sizes = [8, 16], strides = [1, 1]} : vector<8x64xf32> to vector<8x16xf32>
    %206 = vector.extract_strided_slice %203 {offsets = [0, 16], sizes = [8, 16], strides = [1, 1]} : vector<8x64xf32> to vector<8x16xf32>
    %207 = vector.extract_strided_slice %204 {offsets = [0, 32], sizes = [8, 16], strides = [1, 1]} : vector<8x64xf32> to vector<8x16xf32>
    %208 = vector.extract_strided_slice %203 {offsets = [0, 48], sizes = [8, 16], strides = [1, 1]} : vector<8x64xf32> to vector<8x16xf32>
    %209 = arith.mulf %206, %175 : vector<8x16xf32>
    %210 = arith.mulf %205, %207 : vector<8x16xf32>
    %211 = arith.addf %209, %210 : vector<8x16xf32>
    %212 = math.tanh %211 : vector<8x16xf32>
    %213 = arith.mulf %208, %212 : vector<8x16xf32>
    %214 = tpu.concatenate %213, %195 in 1 : vector<8x16xf32>, vector<8x16xf32> -> vector<8x32xf32>
    %cst_37 = arith.constant dense<0.000000e+00> : vector<8x64xf32>
    %215 = tpu.matmul %214, %1, %cst_37 {dimension_numbers = #tpu.dot_dimension_numbers<[1], [0], [0], [1], [0, 0, 1, 1], [], []>} : vector<8x32xf32>, vector<32x64xf32>, vector<8x64xf32> -> vector<8x64xf32>
    %216 = arith.addf %11, %215 : vector<8x64xf32>
    %217 = arith.negf %216 : vector<8x64xf32>
    %218 = math.exp %217 : vector<8x64xf32>
    %cst_38 = arith.constant 1.000000e+00 : f32
    %219 = vector.broadcast %cst_38 : f32 to vector<8x64xf32>
    %220 = arith.addf %219, %218 : vector<8x64xf32>
    %221 = arith.divf %219, %220 : vector<8x64xf32>
    %222 = math.tanh %216 : vector<8x64xf32>
    %223 = vector.extract_strided_slice %221 {offsets = [0, 0], sizes = [8, 16], strides = [1, 1]} : vector<8x64xf32> to vector<8x16xf32>
    %224 = vector.extract_strided_slice %221 {offsets = [0, 16], sizes = [8, 16], strides = [1, 1]} : vector<8x64xf32> to vector<8x16xf32>
    %225 = vector.extract_strided_slice %222 {offsets = [0, 32], sizes = [8, 16], strides = [1, 1]} : vector<8x64xf32> to vector<8x16xf32>
    %226 = vector.extract_strided_slice %221 {offsets = [0, 48], sizes = [8, 16], strides = [1, 1]} : vector<8x64xf32> to vector<8x16xf32>
    %227 = arith.mulf %224, %193 : vector<8x16xf32>
    %228 = arith.mulf %223, %225 : vector<8x16xf32>
    %229 = arith.addf %227, %228 : vector<8x16xf32>
    %230 = math.tanh %229 : vector<8x16xf32>
    %231 = arith.mulf %226, %230 : vector<8x16xf32>
    %232 = vector.extract_strided_slice %8 {offsets = [48, 0], sizes = [8, 64], strides = [1, 1]} : vector<64x64xf32> to vector<8x64xf32>
    %cst_39 = arith.constant dense<0.000000e+00> : vector<8x64xf32>
    %233 = tpu.matmul %213, %0, %cst_39 {dimension_numbers = #tpu.dot_dimension_numbers<[1], [0], [0], [1], [0, 0, 1, 1], [], []>} : vector<8x16xf32>, vector<16x64xf32>, vector<8x64xf32> -> vector<8x64xf32>
    %234 = arith.addf %232, %233 : vector<8x64xf32>
    %235 = arith.negf %234 : vector<8x64xf32>
    %236 = math.exp %235 : vector<8x64xf32>
    %cst_40 = arith.constant 1.000000e+00 : f32
    %237 = vector.broadcast %cst_40 : f32 to vector<8x64xf32>
    %238 = arith.addf %237, %236 : vector<8x64xf32>
    %239 = arith.divf %237, %238 : vector<8x64xf32>
    %240 = math.tanh %234 : vector<8x64xf32>
    %241 = vector.extract_strided_slice %239 {offsets = [0, 0], sizes = [8, 16], strides = [1, 1]} : vector<8x64xf32> to vector<8x16xf32>
    %242 = vector.extract_strided_slice %239 {offsets = [0, 16], sizes = [8, 16], strides = [1, 1]} : vector<8x64xf32> to vector<8x16xf32>
    %243 = vector.extract_strided_slice %240 {offsets = [0, 32], sizes = [8, 16], strides = [1, 1]} : vector<8x64xf32> to vector<8x16xf32>
    %244 = vector.extract_strided_slice %239 {offsets = [0, 48], sizes = [8, 16], strides = [1, 1]} : vector<8x64xf32> to vector<8x16xf32>
    %245 = arith.mulf %242, %211 : vector<8x16xf32>
    %246 = arith.mulf %241, %243 : vector<8x16xf32>
    %247 = arith.addf %245, %246 : vector<8x16xf32>
    %248 = math.tanh %247 : vector<8x16xf32>
    %249 = arith.mulf %244, %248 : vector<8x16xf32>
    %250 = tpu.concatenate %249, %231 in 1 : vector<8x16xf32>, vector<8x16xf32> -> vector<8x32xf32>
    %cst_41 = arith.constant dense<0.000000e+00> : vector<8x64xf32>
    %251 = tpu.matmul %250, %1, %cst_41 {dimension_numbers = #tpu.dot_dimension_numbers<[1], [0], [0], [1], [0, 0, 1, 1], [], []>} : vector<8x32xf32>, vector<32x64xf32>, vector<8x64xf32> -> vector<8x64xf32>
    %252 = arith.addf %11, %251 : vector<8x64xf32>
    %253 = arith.negf %252 : vector<8x64xf32>
    %254 = math.exp %253 : vector<8x64xf32>
    %cst_42 = arith.constant 1.000000e+00 : f32
    %255 = vector.broadcast %cst_42 : f32 to vector<8x64xf32>
    %256 = arith.addf %255, %254 : vector<8x64xf32>
    %257 = arith.divf %255, %256 : vector<8x64xf32>
    %258 = math.tanh %252 : vector<8x64xf32>
    %259 = vector.extract_strided_slice %257 {offsets = [0, 0], sizes = [8, 16], strides = [1, 1]} : vector<8x64xf32> to vector<8x16xf32>
    %260 = vector.extract_strided_slice %257 {offsets = [0, 16], sizes = [8, 16], strides = [1, 1]} : vector<8x64xf32> to vector<8x16xf32>
    %261 = vector.extract_strided_slice %258 {offsets = [0, 32], sizes = [8, 16], strides = [1, 1]} : vector<8x64xf32> to vector<8x16xf32>
    %262 = vector.extract_strided_slice %257 {offsets = [0, 48], sizes = [8, 16], strides = [1, 1]} : vector<8x64xf32> to vector<8x16xf32>
    %263 = arith.mulf %260, %229 : vector<8x16xf32>
    %264 = arith.mulf %259, %261 : vector<8x16xf32>
    %265 = arith.addf %263, %264 : vector<8x16xf32>
    %266 = math.tanh %265 : vector<8x16xf32>
    %267 = arith.mulf %262, %266 : vector<8x16xf32>
    %268 = vector.extract_strided_slice %8 {offsets = [56, 0], sizes = [8, 64], strides = [1, 1]} : vector<64x64xf32> to vector<8x64xf32>
    %cst_43 = arith.constant dense<0.000000e+00> : vector<8x64xf32>
    %269 = tpu.matmul %249, %0, %cst_43 {dimension_numbers = #tpu.dot_dimension_numbers<[1], [0], [0], [1], [0, 0, 1, 1], [], []>} : vector<8x16xf32>, vector<16x64xf32>, vector<8x64xf32> -> vector<8x64xf32>
    %270 = arith.addf %268, %269 : vector<8x64xf32>
    %271 = arith.negf %270 : vector<8x64xf32>
    %272 = math.exp %271 : vector<8x64xf32>
    %cst_44 = arith.constant 1.000000e+00 : f32
    %273 = vector.broadcast %cst_44 : f32 to vector<8x64xf32>
    %274 = arith.addf %273, %272 : vector<8x64xf32>
    %275 = arith.divf %273, %274 : vector<8x64xf32>
    %276 = math.tanh %270 : vector<8x64xf32>
    %277 = vector.extract_strided_slice %275 {offsets = [0, 0], sizes = [8, 16], strides = [1, 1]} : vector<8x64xf32> to vector<8x16xf32>
    %278 = vector.extract_strided_slice %275 {offsets = [0, 16], sizes = [8, 16], strides = [1, 1]} : vector<8x64xf32> to vector<8x16xf32>
    %279 = vector.extract_strided_slice %276 {offsets = [0, 32], sizes = [8, 16], strides = [1, 1]} : vector<8x64xf32> to vector<8x16xf32>
    %280 = vector.extract_strided_slice %275 {offsets = [0, 48], sizes = [8, 16], strides = [1, 1]} : vector<8x64xf32> to vector<8x16xf32>
    %281 = arith.mulf %278, %247 : vector<8x16xf32>
    %282 = arith.mulf %277, %279 : vector<8x16xf32>
    %283 = arith.addf %281, %282 : vector<8x16xf32>
    %284 = math.tanh %283 : vector<8x16xf32>
    %285 = arith.mulf %280, %284 : vector<8x16xf32>
    %286 = tpu.concatenate %285, %267 in 1 : vector<8x16xf32>, vector<8x16xf32> -> vector<8x32xf32>
    %cst_45 = arith.constant dense<0.000000e+00> : vector<8x64xf32>
    %287 = tpu.matmul %286, %1, %cst_45 {dimension_numbers = #tpu.dot_dimension_numbers<[1], [0], [0], [1], [0, 0, 1, 1], [], []>} : vector<8x32xf32>, vector<32x64xf32>, vector<8x64xf32> -> vector<8x64xf32>
    %288 = arith.addf %11, %287 : vector<8x64xf32>
    %289 = arith.negf %288 : vector<8x64xf32>
    %290 = math.exp %289 : vector<8x64xf32>
    %cst_46 = arith.constant 1.000000e+00 : f32
    %291 = vector.broadcast %cst_46 : f32 to vector<8x64xf32>
    %292 = arith.addf %291, %290 : vector<8x64xf32>
    %293 = arith.divf %291, %292 : vector<8x64xf32>
    %294 = math.tanh %288 : vector<8x64xf32>
    %295 = vector.extract_strided_slice %293 {offsets = [0, 0], sizes = [8, 16], strides = [1, 1]} : vector<8x64xf32> to vector<8x16xf32>
    %296 = vector.extract_strided_slice %293 {offsets = [0, 16], sizes = [8, 16], strides = [1, 1]} : vector<8x64xf32> to vector<8x16xf32>
    %297 = vector.extract_strided_slice %294 {offsets = [0, 32], sizes = [8, 16], strides = [1, 1]} : vector<8x64xf32> to vector<8x16xf32>
    %298 = vector.extract_strided_slice %293 {offsets = [0, 48], sizes = [8, 16], strides = [1, 1]} : vector<8x64xf32> to vector<8x16xf32>
    %299 = arith.mulf %296, %265 : vector<8x16xf32>
    %300 = arith.mulf %295, %297 : vector<8x16xf32>
    %301 = arith.addf %299, %300 : vector<8x16xf32>
    %302 = math.tanh %301 : vector<8x16xf32>
    %303 = arith.mulf %298, %302 : vector<8x16xf32>
    %304 = tpu.concatenate %51, %87, %123, %159, %195, %231, %267, %303 in 0 : vector<8x16xf32>, vector<8x16xf32>, vector<8x16xf32>, vector<8x16xf32>, vector<8x16xf32>, vector<8x16xf32>, vector<8x16xf32>, vector<8x16xf32> -> vector<64x16xf32>
    %c0_47 = arith.constant 0 : index
    %c0_48 = arith.constant 0 : index
    %305 = vector.load %arg6[%c0_47, %c0_48] : memref<16x3xf32, #tpu.memory_space<vmem>>, vector<16x3xf32>
    %cst_49 = arith.constant dense<0.000000e+00> : vector<64x3xf32>
    %306 = tpu.matmul %304, %305, %cst_49 {dimension_numbers = #tpu.dot_dimension_numbers<[1], [0], [0], [1], [0, 0, 1, 1], [], []>} : vector<64x16xf32>, vector<16x3xf32>, vector<64x3xf32> -> vector<64x3xf32>
    %c0_50 = arith.constant 0 : index
    %c0_51 = arith.constant 0 : index
    %307 = vector.load %arg7[%c0_50, %c0_51] : memref<1x3xf32, #tpu.memory_space<vmem>>, vector<1x3xf32>
    %308 = vector.shape_cast %307 : vector<1x3xf32> to vector<1x3xf32>
    %309 = vector.broadcast %308 : vector<1x3xf32> to vector<64x3xf32>
    %310 = arith.addf %306, %309 : vector<64x3xf32>
    %c0_52 = arith.constant 0 : index
    %c0_53 = arith.constant 0 : index
    %311 = vector.load %arg8[%c0_52, %c0_53] : memref<64x3xf32, #tpu.memory_space<vmem>>, vector<64x3xf32>
    tpu.vector_store %arg8[%c0_52, %c0_53], %310 {strides = array<i32>} : memref<64x3xf32, #tpu.memory_space<vmem>>, vector<64x3xf32>,
    return
  }
}

</mosaic_0001>

<llo_original>
// kernel: tpu_custom_call.1
$region0: #{tpu_custom_call.1}
  #allocation0 [shape = 'u32[]', space=smem, size = 0x4, offset = 0x4, fixed_abs, tag = 'smem constant byte address 0x4 - core index']
  #allocation1 [shape = 'u32[144,128]{1,0:T(1,128)}', space=vmem, size = 0x12000, scoped, tag = 'internal scratch']
  %s0 = inlined_call_operand.vmem [shape: f32[64,5], index: 0, kind: input, shape index: {}]
  %s1 = inlined_call_operand.vmem [shape: f32[5,64], index: 1, kind: input, shape index: {}]
  %s2 = inlined_call_operand.vmem [shape: f32[16,64], index: 2, kind: input, shape index: {}]
  %s3 = inlined_call_operand.vmem [shape: f32[1,64], index: 3, kind: input, shape index: {}]
  %s4 = inlined_call_operand.vmem [shape: f32[32,64], index: 4, kind: input, shape index: {}]
  %s5 = inlined_call_operand.vmem [shape: f32[1,64], index: 5, kind: input, shape index: {}]
  %s6 = inlined_call_operand.vmem [shape: f32[16,3], index: 6, kind: input, shape index: {}]
  %s7 = inlined_call_operand.vmem [shape: f32[1,3], index: 7, kind: input, shape index: {}]
  %s8 = inlined_call_operand.vmem [shape: f32[64,3], index: 8, kind: output, shape index: {}]
  %s9 = sld [smem:[#allocation0]]
  $region42: #{tpu_custom_call.1} parent=0
    _
  %s11 = ssub.s32 1, %s9
  %s12 = scalar_select 0, %s11, %s9
  // Predicated region
  $region2: #{tpu_custom_call.1} parent=0 // pred_check
    _
  $region3: #{tpu_custom_call.1} parent=0 // pred_check_branch
    %14 = sbr.rel (0) target = $region5
  $region4: #{tpu_custom_call.1} parent=0 // pred_region
    _
  $region5: #{tpu_custom_call.1} parent=0 // pred_fallthru
    _
  // Predicated region
  $region6: #{tpu_custom_call.1} parent=0 // pred_check
    _
  $region7: #{tpu_custom_call.1} parent=0 // pred_check_branch
    %16 = sbr.rel (0) target = $region9
  $region8: #{tpu_custom_call.1} parent=0 // pred_region
    _
  $region9: #{tpu_custom_call.1} parent=0 // pred_fallthru
    _
  // Predicated region
  $region10: #{tpu_custom_call.1} parent=0 // pred_check
    _
  $region11: #{tpu_custom_call.1} parent=0 // pred_check_branch
    %18 = sbr.rel (0) target = $region13
  $region12: #{tpu_custom_call.1} parent=0 // pred_region
    _
  $region13: #{tpu_custom_call.1} parent=0 // pred_fallthru
    _
  // Predicated region
  $region14: #{tpu_custom_call.1} parent=0 // pred_check
    _
  $region15: #{tpu_custom_call.1} parent=0 // pred_check_branch
    %20 = sbr.rel (0) target = $region17
  $region16: #{tpu_custom_call.1} parent=0 // pred_region
    _
  $region17: #{tpu_custom_call.1} parent=0 // pred_fallthru
    _
  // Predicated region
  $region18: #{tpu_custom_call.1} parent=0 // pred_check
    _
  $region19: #{tpu_custom_call.1} parent=0 // pred_check_branch
    %22 = sbr.rel (0) target = $region21
  $region20: #{tpu_custom_call.1} parent=0 // pred_region
    _
  $region21: #{tpu_custom_call.1} parent=0 // pred_fallthru
    _
  // Predicated region
  $region22: #{tpu_custom_call.1} parent=0 // pred_check
    _
  $region23: #{tpu_custom_call.1} parent=0 // pred_check_branch
    %24 = sbr.rel (0) target = $region25
  $region24: #{tpu_custom_call.1} parent=0 // pred_region
    _
  $region25: #{tpu_custom_call.1} parent=0 // pred_fallthru
    _
  // Predicated region
  $region26: #{tpu_custom_call.1} parent=0 // pred_check
    _
  $region27: #{tpu_custom_call.1} parent=0 // pred_check_branch
    %26 = sbr.rel (0) target = $region29
  $region28: #{tpu_custom_call.1} parent=0 // pred_region
    _
  $region29: #{tpu_custom_call.1} parent=0 // pred_fallthru
    _
  // Predicated region
  $region30: #{tpu_custom_call.1} parent=0 // pred_check
    _
  $region31: #{tpu_custom_call.1} parent=0 // pred_check_branch
    %28 = sbr.rel (0) target = $region33
  $region32: #{tpu_custom_call.1} parent=0 // pred_region
    _
  $region33: #{tpu_custom_call.1} parent=0 // pred_fallthru
    _
  %v29 = vld [vmem:[%s2] sm:$0xff]
  %v30 = vld [vmem:[%s2 + $0x8] sm:$0xff]
  %v31 = vld [vmem:[%s4] sm:$0xff]
  %v32 = vld [vmem:[%s4 + $0x8] sm:$0xff]
  %v33 = vld [vmem:[%s4 + $0x10] sm:$0xff]
  %v34 = vld [vmem:[%s4 + $0x18] sm:$0xff]
  %v35 = vld [vmem:[%s0] sm:$0xff]
  %v36 = vld [vmem:[%s0 + $0x8] sm:$0xff]
  %v37 = vld [vmem:[%s0 + $0x10] sm:$0xff]
  %v38 = vld [vmem:[%s0 + $0x18] sm:$0xff]
  %v39 = vld [vmem:[%s0 + $0x20] sm:$0xff]
  %v40 = vld [vmem:[%s0 + $0x28] sm:$0xff]
  %v41 = vld [vmem:[%s0 + $0x30] sm:$0xff]
  %v42 = vld [vmem:[%s0 + $0x38] sm:$0xff]
  %v43 = vld [vmem:[%s1] sm:$0x1f]
  %v44 = vld [vmem:[%s3] sm:$0x1]
  %v46 = vlaneseq
  %v47 = vshrl.u32 %v46, 7
  %v48 = vsub.s32 0, %v47
  %v49 = vrot.slane %v44, %v48
  %vm51 = vcmask 39936
  %v53 = vsel %vm51, %v35, 0
  %v56 = vsel %vm51, %v36, 0
  %v59 = vsel %vm51, %v37, 0
  %v62 = vsel %vm51, %v38, 0
  %v65 = vsel %vm51, %v39, 0
  %v68 = vsel %vm51, %v40, 0
  %v71 = vsel %vm51, %v41, 0
  %v74 = vsel %vm51, %v42, 0
  %vm76 = vcmask 1044480
  %v78 = vsel %vm76, %v43, 0
  %80 = vmatprep.subr.mxu0 0.0
  %81 = vmatpush1.msra.mxu0 0.0
  %82 = vmatprep.subr.mxu0 0.0
  %83 = vmatpush1.msra.mxu0 0.0
  %84 = vmatprep.subr.mxu0 0.0
  %85 = vmatpush1.msra.mxu0 0.0
  %86 = vmatprep.subr.mxu0 0.0
  %87 = vmatpush1.msra.mxu0 0.0
  %88 = vmatprep.subr.mxu0 0.0
  %89 = vmatpush1.msra.mxu0 0.0
  %90 = vmatprep.subr.mxu0 0.0
  %91 = vmatpush1.msra.mxu0 0.0
  %92 = vmatprep.subr.mxu0 0.0
  %93 = vmatpush1.msra.mxu0 0.0
  %94 = vmatprep.subr.mxu0 0.0
  %95 = vmatpush1.msra.mxu0 0.0
  %96 = vmatprep.subr.mxu0 0.0
  %97 = vmatpush1.msra.mxu0 0.0
  %98 = vmatprep.subr.mxu0 0.0
  %99 = vmatpush1.msra.mxu0 0.0
  %100 = vmatprep.subr.mxu0 0.0
  %101 = vmatpush1.msra.mxu0 0.0
  %102 = vmatprep.subr.mxu0 0.0
  %103 = vmatpush1.msra.mxu0 0.0
  %104 = vmatprep.subr.mxu0 0.0
  %105 = vmatpush1.msra.mxu0 0.0
  %106 = vmatprep.subr.mxu0 0.0
  %107 = vmatpush1.msra.mxu0 0.0
  %108 = vmatprep.subr.mxu0 0.0
  %109 = vmatpush1.msra.mxu0 0.0
  %110 = vmatprep.subr.mxu0 0.0
  %111 = vmatpush1.msra.mxu0 %v78
  %112 = vmatprep.subr.mxu0 0.0
  %113 = vmatpush2.msra.mxu0 0.0
  %114 = vmatprep.subr.mxu0 0.0
  %115 = vmatpush2.msra.mxu0 0.0
  %116 = vmatprep.subr.mxu0 0.0
  %117 = vmatpush2.msra.mxu0 0.0
  %118 = vmatprep.subr.mxu0 0.0
  %119 = vmatpush2.msra.mxu0 0.0
  %120 = vmatprep.subr.mxu0 0.0
  %121 = vmatpush2.msra.mxu0 0.0
  %122 = vmatprep.subr.mxu0 0.0
  %123 = vmatpush2.msra.mxu0 0.0
  %124 = vmatprep.subr.mxu0 0.0
  %125 = vmatpush2.msra.mxu0 0.0
  %126 = vmatprep.subr.mxu0 0.0
  %127 = vmatpush2.msra.mxu0 0.0
  %128 = vmatprep.subr.mxu0 0.0
  %129 = vmatpush2.msra.mxu0 0.0
  %130 = vmatprep.subr.mxu0 0.0
  %131 = vmatpush2.msra.mxu0 0.0
  %132 = vmatprep.subr.mxu0 0.0
  %133 = vmatpush2.msra.mxu0 0.0
  %134 = vmatprep.subr.mxu0 0.0
  %135 = vmatpush2.msra.mxu0 0.0
  %136 = vmatprep.subr.mxu0 0.0
  %137 = vmatpush2.msra.mxu0 0.0
  %138 = vmatprep.subr.mxu0 0.0
  %139 = vmatpush2.msra.mxu0 0.0
  %140 = vmatprep.subr.mxu0 0.0
  %141 = vmatpush2.msra.mxu0 0.0
  %142 = vmatprep.subr.mxu0 0.0
  %143 = vmatpush2.msra.mxu0 0.0
  %144 = vmatprep.mubr.f32.mxu0 0.0
  %145 = vmatmul.mubr.f32.gmra.mxu0 %v53
  %v146 = vpop.f32.mrf.mxu0
  %v147 = vadd.f32 %v49, %v146
  %v148 = vpop.f32.mrf.mxu0
  %149 = vmatprep.mubr.f32.mxu0 0.0
  %150 = vmatmul.mubr.f32.gmra.mxu0 %v56
  %v151 = vpop.f32.mrf.mxu0
  %v152 = vadd.f32 %v49, %v151
  %v153 = vpop.f32.mrf.mxu0
  %154 = vmatprep.mubr.f32.mxu0 0.0
  %155 = vmatmul.mubr.f32.gmra.mxu0 %v59
  %v156 = vpop.f32.mrf.mxu0
  %v157 = vadd.f32 %v49, %v156
  %v158 = vpop.f32.mrf.mxu0
  %159 = vmatprep.mubr.f32.mxu0 0.0
  %160 = vmatmul.mubr.f32.gmra.mxu0 %v62
  %v161 = vpop.f32.mrf.mxu0
  %v162 = vadd.f32 %v49, %v161
  %v163 = vpop.f32.mrf.mxu0
  %164 = vmatprep.mubr.f32.mxu0 0.0
  %165 = vmatmul.mubr.f32.gmra.mxu0 %v65
  %v166 = vpop.f32.mrf.mxu0
  %v167 = vadd.f32 %v49, %v166
  %v168 = vpop.f32.mrf.mxu0
  %169 = vmatprep.mubr.f32.mxu0 0.0
  %170 = vmatmul.mubr.f32.gmra.mxu0 %v68
  %v171 = vpop.f32.mrf.mxu0
  %v172 = vadd.f32 %v49, %v171
  %v173 = vpop.f32.mrf.mxu0
  %174 = vmatprep.mubr.f32.mxu0 0.0
  %175 = vmatmul.mubr.f32.gmra.mxu0 %v71
  %v176 = vpop.f32.mrf.mxu0
  %v177 = vadd.f32 %v49, %v176
  %v178 = vpop.f32.mrf.mxu0
  %179 = vmatprep.mubr.f32.mxu0 0.0
  %180 = vmatmul.mubr.f32.gmra.mxu0 %v74
  %v181 = vpop.f32.mrf.mxu0
  %v182 = vadd.f32 %v49, %v181
  %v183 = vpop.f32.mrf.mxu0
  %184 = vdwg.mxu0
  %v185 = vld [vmem:[%s5] sm:$0x1]
  %v187 = vlaneseq
  %v188 = vshrl.u32 %v187, 7
  %v189 = vsub.s32 0, %v188
  %v190 = vrot.slane %v185, %v189
  %vm192 = vcmask 130048
  %v194 = vsel %vm192, 0.0, 0
  %196 = vmatprep.subr.mxu0 0.0
  %197 = vmatpush1.msra.mxu0 0.0
  %198 = vmatprep.subr.mxu0 0.0
  %199 = vmatpush1.msra.mxu0 0.0
  %200 = vmatprep.subr.mxu0 0.0
  %201 = vmatpush1.msra.mxu0 0.0
  %202 = vmatprep.subr.mxu0 0.0
  %203 = vmatpush1.msra.mxu0 0.0
  %204 = vmatprep.subr.mxu0 0.0
  %205 = vmatpush1.msra.mxu0 0.0
  %206 = vmatprep.subr.mxu0 0.0
  %207 = vmatpush1.msra.mxu0 0.0
  %208 = vmatprep.subr.mxu0 0.0
  %209 = vmatpush1.msra.mxu0 0.0
  %210 = vmatprep.subr.mxu0 0.0
  %211 = vmatpush1.msra.mxu0 0.0
  %212 = vmatprep.subr.mxu0 0.0
  %213 = vmatpush1.msra.mxu0 0.0
  %214 = vmatprep.subr.mxu0 0.0
  %215 = vmatpush1.msra.mxu0 0.0
  %216 = vmatprep.subr.mxu0 0.0
  %217 = vmatpush1.msra.mxu0 0.0
  %218 = vmatprep.subr.mxu0 0.0
  %219 = vmatpush1.msra.mxu0 0.0
  %220 = vmatprep.subr.mxu0 0.0
  %221 = vmatpush1.msra.mxu0 0.0
  %222 = vmatprep.subr.mxu0 0.0
  %223 = vmatpush1.msra.mxu0 0.0
  %224 = vmatprep.subr.mxu0 0.0
  %225 = vmatpush1.msra.mxu0 %v30
  %226 = vmatprep.subr.mxu0 0.0
  %227 = vmatpush1.msra.mxu0 %v29
  %228 = vmatprep.subr.mxu0 0.0
  %229 = vmatpush2.msra.mxu0 0.0
  %230 = vmatprep.subr.mxu0 0.0
  %231 = vmatpush2.msra.mxu0 0.0
  %232 = vmatprep.subr.mxu0 0.0
  %233 = vmatpush2.msra.mxu0 0.0
  %234 = vmatprep.subr.mxu0 0.0
  %235 = vmatpush2.msra.mxu0 0.0
  %236 = vmatprep.subr.mxu0 0.0
  %237 = vmatpush2.msra.mxu0 0.0
  %238 = vmatprep.subr.mxu0 0.0
  %239 = vmatpush2.msra.mxu0 0.0
  %240 = vmatprep.subr.mxu0 0.0
  %241 = vmatpush2.msra.mxu0 0.0
  %242 = vmatprep.subr.mxu0 0.0
  %243 = vmatpush2.msra.mxu0 0.0
  %244 = vmatprep.subr.mxu0 0.0
  %245 = vmatpush2.msra.mxu0 0.0
  %246 = vmatprep.subr.mxu0 0.0
  %247 = vmatpush2.msra.mxu0 0.0
  %248 = vmatprep.subr.mxu0 0.0
  %249 = vmatpush2.msra.mxu0 0.0
  %250 = vmatprep.subr.mxu0 0.0
  %251 = vmatpush2.msra.mxu0 0.0
  %252 = vmatprep.subr.mxu0 0.0
  %253 = vmatpush2.msra.mxu0 0.0
  %254 = vmatprep.subr.mxu0 0.0
  %255 = vmatpush2.msra.mxu0 0.0
  %256 = vmatprep.subr.mxu0 0.0
  %257 = vmatpush2.msra.mxu0 0.0
  %258 = vmatprep.subr.mxu0 0.0
  %259 = vmatpush2.msra.mxu0 0.0
  %260 = vmatprep.mubr.f32.mxu0 0.0
  %261 = vmatmul.mubr.f32.gmra.mxu0 %v194
  %v262 = vpop.f32.mrf.mxu0
  %v263 = vadd.f32 0.0, %v262
  %v264 = vpop.f32.mrf.mxu0
  %265 = vdwg.mxu0
  %v266 = vadd.f32 %v147, %v263
  %v267 = vxor.u32 %v266, 2147483648
  %v268 = vmul.f32 %v267, 1.442695
  %v269 = vpow.pop %v268
  %v270 = vadd.f32 %v269, 1.0
  %v271 = vrcp.pop %v270
  %v272 = vmul.f32 1.0, %v271
  %v273 = vtanh.pop %v266
  %v274 = vmul.f32 %v272, 0.0
  %276 = vrot.lane.b32.xlu0 %v273, 96
  %v277 = vpop.permute.xlu0 %276
  %v279 = vmul.f32 %v272, %v277
  %281 = vrot.lane.b32.xlu0 %v279, 16
  %v282 = vpop.permute.xlu0 %281
  %v284 = vadd.f32 %v274, %v282
  %v285 = vtanh.pop %v284
  %287 = vrot.lane.b32.xlu0 %v285, 32
  %v288 = vpop.permute.xlu0 %287
  %v290 = vmul.f32 %v272, %v288
  %292 = vrot.lane.b32.xlu0 %v290, 80
  %v293 = vpop.permute.xlu0 %292
  %v295 = vsel %vm192, %v293, 0.0
  %vm296 = vcmask 261120
  %v298 = vsel %vm296, %v295, 0
  %300 = vmatprep.subr.mxu0 0.0
  %301 = vmatpush1.msra.mxu0 0.0
  %302 = vmatprep.subr.mxu0 0.0
  %303 = vmatpush1.msra.mxu0 0.0
  %304 = vmatprep.subr.mxu0 0.0
  %305 = vmatpush1.msra.mxu0 0.0
  %306 = vmatprep.subr.mxu0 0.0
  %307 = vmatpush1.msra.mxu0 0.0
  %308 = vmatprep.subr.mxu0 0.0
  %309 = vmatpush1.msra.mxu0 0.0
  %310 = vmatprep.subr.mxu0 0.0
  %311 = vmatpush1.msra.mxu0 0.0
  %312 = vmatprep.subr.mxu0 0.0
  %313 = vmatpush1.msra.mxu0 0.0
  %314 = vmatprep.subr.mxu0 0.0
  %315 = vmatpush1.msra.mxu0 0.0
  %316 = vmatprep.subr.mxu0 0.0
  %317 = vmatpush1.msra.mxu0 0.0
  %318 = vmatprep.subr.mxu0 0.0
  %319 = vmatpush1.msra.mxu0 0.0
  %320 = vmatprep.subr.mxu0 0.0
  %321 = vmatpush1.msra.mxu0 0.0
  %322 = vmatprep.subr.mxu0 0.0
  %323 = vmatpush1.msra.mxu0 0.0
  %324 = vmatprep.subr.mxu0 0.0
  %325 = vmatpush1.msra.mxu0 %v34
  %326 = vmatprep.subr.mxu0 0.0
  %327 = vmatpush1.msra.mxu0 %v33
  %328 = vmatprep.subr.mxu0 0.0
  %329 = vmatpush1.msra.mxu0 %v32
  %330 = vmatprep.subr.mxu0 0.0
  %331 = vmatpush1.msra.mxu0 %v31
  %332 = vmatprep.subr.mxu0 0.0
  %333 = vmatpush2.msra.mxu0 0.0
  %334 = vmatprep.subr.mxu0 0.0
  %335 = vmatpush2.msra.mxu0 0.0
  %336 = vmatprep.subr.mxu0 0.0
  %337 = vmatpush2.msra.mxu0 0.0
  %338 = vmatprep.subr.mxu0 0.0
  %339 = vmatpush2.msra.mxu0 0.0
  %340 = vmatprep.subr.mxu0 0.0
  %341 = vmatpush2.msra.mxu0 0.0
  %342 = vmatprep.subr.mxu0 0.0
  %343 = vmatpush2.msra.mxu0 0.0
  %344 = vmatprep.subr.mxu0 0.0
  %345 = vmatpush2.msra.mxu0 0.0
  %346 = vmatprep.subr.mxu0 0.0
  %347 = vmatpush2.msra.mxu0 0.0
  %348 = vmatprep.subr.mxu0 0.0
  %349 = vmatpush2.msra.mxu0 0.0
  %350 = vmatprep.subr.mxu0 0.0
  %351 = vmatpush2.msra.mxu0 0.0
  %352 = vmatprep.subr.mxu0 0.0
  %353 = vmatpush2.msra.mxu0 0.0
  %354 = vmatprep.subr.mxu0 0.0
  %355 = vmatpush2.msra.mxu0 0.0
  %356 = vmatprep.subr.mxu0 0.0
  %357 = vmatpush2.msra.mxu0 0.0
  %358 = vmatprep.subr.mxu0 0.0
  %359 = vmatpush2.msra.mxu0 0.0
  %360 = vmatprep.subr.mxu0 0.0
  %361 = vmatpush2.msra.mxu0 0.0
  %362 = vmatprep.subr.mxu0 0.0
  %363 = vmatpush2.msra.mxu0 0.0
  %364 = vmatprep.mubr.f32.mxu0 0.0
  %365 = vmatmul.mubr.f32.gmra.mxu0 %v298
  %v366 = vpop.f32.mrf.mxu0
  %v367 = vadd.f32 0.0, %v366
  %v368 = vpop.f32.mrf.mxu0
  %369 = vdwg.mxu0
  %v370 = vadd.f32 %v190, %v367
  %v371 = vxor.u32 %v370, 2147483648
  %v372 = vmul.f32 %v371, 1.442695
  %v373 = vpow.pop %v372
  %v374 = vadd.f32 %v373, 1.0
  %v375 = vrcp.pop %v374
  %v376 = vmul.f32 1.0, %v375
  %v377 = vtanh.pop %v370
  %v378 = vmul.f32 %v376, 0.0
  %380 = vrot.lane.b32.xlu0 %v377, 96
  %v381 = vpop.permute.xlu0 %380
  %v383 = vmul.f32 %v376, %v381
  %385 = vrot.lane.b32.xlu0 %v383, 16
  %v386 = vpop.permute.xlu0 %385
  %v388 = vadd.f32 %v378, %v386
  %v389 = vtanh.pop %v388
  %391 = vrot.lane.b32.xlu0 %v389, 32
  %v392 = vpop.permute.xlu0 %391
  %v394 = vmul.f32 %v376, %v392
  %v395 = vsel %vm192, %v293, 0
  %397 = vmatprep.subr.mxu0 0.0
  %398 = vmatpush1.msra.mxu0 0.0
  %399 = vmatprep.subr.mxu0 0.0
  %400 = vmatpush1.msra.mxu0 0.0
  %401 = vmatprep.subr.mxu0 0.0
  %402 = vmatpush1.msra.mxu0 0.0
  %403 = vmatprep.subr.mxu0 0.0
  %404 = vmatpush1.msra.mxu0 0.0
  %405 = vmatprep.subr.mxu0 0.0
  %406 = vmatpush1.msra.mxu0 0.0
  %407 = vmatprep.subr.mxu0 0.0
  %408 = vmatpush1.msra.mxu0 0.0
  %409 = vmatprep.subr.mxu0 0.0
  %410 = vmatpush1.msra.mxu0 0.0
  %411 = vmatprep.subr.mxu0 0.0
  %412 = vmatpush1.msra.mxu0 0.0
  %413 = vmatprep.subr.mxu0 0.0
  %414 = vmatpush1.msra.mxu0 0.0
  %415 = vmatprep.subr.mxu0 0.0
  %416 = vmatpush1.msra.mxu0 0.0
  %417 = vmatprep.subr.mxu0 0.0
  %418 = vmatpush1.msra.mxu0 0.0
  %419 = vmatprep.subr.mxu0 0.0
  %420 = vmatpush1.msra.mxu0 0.0
  %421 = vmatprep.subr.mxu0 0.0
  %422 = vmatpush1.msra.mxu0 0.0
  %423 = vmatprep.subr.mxu0 0.0
  %424 = vmatpush1.msra.mxu0 0.0
  %425 = vmatprep.subr.mxu0 0.0
  %426 = vmatpush1.msra.mxu0 %v30
  %427 = vmatprep.subr.mxu0 0.0
  %428 = vmatpush1.msra.mxu0 %v29
  %429 = vmatprep.subr.mxu0 0.0
  %430 = vmatpush2.msra.mxu0 0.0
  %431 = vmatprep.subr.mxu0 0.0
  %432 = vmatpush2.msra.mxu0 0.0
  %433 = vmatprep.subr.mxu0 0.0
  %434 = vmatpush2.msra.mxu0 0.0
  %435 = vmatprep.subr.mxu0 0.0
  %436 = vmatpush2.msra.mxu0 0.0
  %437 = vmatprep.subr.mxu0 0.0
  %438 = vmatpush2.msra.mxu0 0.0
  %439 = vmatprep.subr.mxu0 0.0
  %440 = vmatpush2.msra.mxu0 0.0
  %441 = vmatprep.subr.mxu0 0.0
  %442 = vmatpush2.msra.mxu0 0.0
  %443 = vmatprep.subr.mxu0 0.0
  %444 = vmatpush2.msra.mxu0 0.0
  %445 = vmatprep.subr.mxu0 0.0
  %446 = vmatpush2.msra.mxu0 0.0
  %447 = vmatprep.subr.mxu0 0.0
  %448 = vmatpush2.msra.mxu0 0.0
  %449 = vmatprep.subr.mxu0 0.0
  %450 = vmatpush2.msra.mxu0 0.0
  %451 = vmatprep.subr.mxu0 0.0
  %452 = vmatpush2.msra.mxu0 0.0
  %453 = vmatprep.subr.mxu0 0.0
  %454 = vmatpush2.msra.mxu0 0.0
  %455 = vmatprep.subr.mxu0 0.0
  %456 = vmatpush2.msra.mxu0 0.0
  %457 = vmatprep.subr.mxu0 0.0
  %458 = vmatpush2.msra.mxu0 0.0
  %459 = vmatprep.subr.mxu0 0.0
  %460 = vmatpush2.msra.mxu0 0.0
  %461 = vmatprep.mubr.f32.mxu0 0.0
  %462 = vmatmul.mubr.f32.gmra.mxu0 %v395
  %v463 = vpop.f32.mrf.mxu0
  %v464 = vadd.f32 0.0, %v463
  %v465 = vpop.f32.mrf.mxu0
  %466 = vdwg.mxu0
  %v467 = vadd.f32 %v152, %v464
  %v468 = vxor.u32 %v467, 2147483648
  %v469 = vmul.f32 %v468, 1.442695
  %v470 = vpow.pop %v469
  %v471 = vadd.f32 %v470, 1.0
  %v472 = vrcp.pop %v471
  %v473 = vmul.f32 1.0, %v472
  %v474 = vtanh.pop %v467
  %v475 = vmul.f32 %v473, %v284
  %477 = vrot.lane.b32.xlu0 %v474, 96
  %v478 = vpop.permute.xlu0 %477
  %v480 = vmul.f32 %v473, %v478
  %482 = vrot.lane.b32.xlu0 %v480, 16
  %v483 = vpop.permute.xlu0 %482
  %v485 = vadd.f32 %v475, %v483
  %v486 = vtanh.pop %v485
  %488 = vrot.lane.b32.xlu0 %v486, 32
  %v489 = vpop.permute.xlu0 %488
  %v491 = vmul.f32 %v473, %v489
  %493 = vrot.lane.b32.xlu0 %v491, 80
  %v494 = vpop.permute.xlu0 %493
  %497 = vrot.lane.b32.xlu0 %v394, 96
  %v498 = vpop.permute.xlu0 %497
  %v500 = vsel %vm192, %v494, %v498
  %v502 = vsel %vm296, %v500, 0
  %504 = vmatprep.subr.mxu0 0.0
  %505 = vmatpush1.msra.mxu0 0.0
  %506 = vmatprep.subr.mxu0 0.0
  %507 = vmatpush1.msra.mxu0 0.0
  %508 = vmatprep.subr.mxu0 0.0
  %509 = vmatpush1.msra.mxu0 0.0
  %510 = vmatprep.subr.mxu0 0.0
  %511 = vmatpush1.msra.mxu0 0.0
  %512 = vmatprep.subr.mxu0 0.0
  %513 = vmatpush1.msra.mxu0 0.0
  %514 = vmatprep.subr.mxu0 0.0
  %515 = vmatpush1.msra.mxu0 0.0
  %516 = vmatprep.subr.mxu0 0.0
  %517 = vmatpush1.msra.mxu0 0.0
  %518 = vmatprep.subr.mxu0 0.0
  %519 = vmatpush1.msra.mxu0 0.0
  %520 = vmatprep.subr.mxu0 0.0
  %521 = vmatpush1.msra.mxu0 0.0
  %522 = vmatprep.subr.mxu0 0.0
  %523 = vmatpush1.msra.mxu0 0.0
  %524 = vmatprep.subr.mxu0 0.0
  %525 = vmatpush1.msra.mxu0 0.0
  %526 = vmatprep.subr.mxu0 0.0
  %527 = vmatpush1.msra.mxu0 0.0
  %528 = vmatprep.subr.mxu0 0.0
  %529 = vmatpush1.msra.mxu0 %v34
  %530 = vmatprep.subr.mxu0 0.0
  %531 = vmatpush1.msra.mxu0 %v33
  %532 = vmatprep.subr.mxu0 0.0
  %533 = vmatpush1.msra.mxu0 %v32
  %534 = vmatprep.subr.mxu0 0.0
  %535 = vmatpush1.msra.mxu0 %v31
  %536 = vmatprep.subr.mxu0 0.0
  %537 = vmatpush2.msra.mxu0 0.0
  %538 = vmatprep.subr.mxu0 0.0
  %539 = vmatpush2.msra.mxu0 0.0
  %540 = vmatprep.subr.mxu0 0.0
  %541 = vmatpush2.msra.mxu0 0.0
  %542 = vmatprep.subr.mxu0 0.0
  %543 = vmatpush2.msra.mxu0 0.0
  %544 = vmatprep.subr.mxu0 0.0
  %545 = vmatpush2.msra.mxu0 0.0
  %546 = vmatprep.subr.mxu0 0.0
  %547 = vmatpush2.msra.mxu0 0.0
  %548 = vmatprep.subr.mxu0 0.0
  %549 = vmatpush2.msra.mxu0 0.0
  %550 = vmatprep.subr.mxu0 0.0
  %551 = vmatpush2.msra.mxu0 0.0
  %552 = vmatprep.subr.mxu0 0.0
  %553 = vmatpush2.msra.mxu0 0.0
  %554 = vmatprep.subr.mxu0 0.0
  %555 = vmatpush2.msra.mxu0 0.0
  %556 = vmatprep.subr.mxu0 0.0
  %557 = vmatpush2.msra.mxu0 0.0
  %558 = vmatprep.subr.mxu0 0.0
  %559 = vmatpush2.msra.mxu0 0.0
  %560 = vmatprep.subr.mxu0 0.0
  %561 = vmatpush2.msra.mxu0 0.0
  %562 = vmatprep.subr.mxu0 0.0
  %563 = vmatpush2.msra.mxu0 0.0
  %564 = vmatprep.subr.mxu0 0.0
  %565 = vmatpush2.msra.mxu0 0.0
  %566 = vmatprep.subr.mxu0 0.0
  %567 = vmatpush2.msra.mxu0 0.0
  %568 = vmatprep.mubr.f32.mxu0 0.0
  %569 = vmatmul.mubr.f32.gmra.mxu0 %v502
  %v570 = vpop.f32.mrf.mxu0
  %v571 = vadd.f32 0.0, %v570
  %v572 = vpop.f32.mrf.mxu0
  %573 = vdwg.mxu0
  %v574 = vadd.f32 %v190, %v571
  %v575 = vxor.u32 %v574, 2147483648
  %v576 = vmul.f32 %v575, 1.442695
  %v577 = vpow.pop %v576
  %v578 = vadd.f32 %v577, 1.0
  %v579 = vrcp.pop %v578
  %v580 = vmul.f32 1.0, %v579
  %v581 = vtanh.pop %v574
  %v582 = vmul.f32 %v580, %v388
  %584 = vrot.lane.b32.xlu0 %v581, 96
  %v585 = vpop.permute.xlu0 %584
  %v587 = vmul.f32 %v580, %v585
  %589 = vrot.lane.b32.xlu0 %v587, 16
  %v590 = vpop.permute.xlu0 %589
  %v592 = vadd.f32 %v582, %v590
  %v593 = vtanh.pop %v592
  %595 = vrot.lane.b32.xlu0 %v593, 32
  %v596 = vpop.permute.xlu0 %595
  %v598 = vmul.f32 %v580, %v596
  %v599 = vsel %vm192, %v494, 0
  %601 = vmatprep.subr.mxu0 0.0
  %602 = vmatpush1.msra.mxu0 0.0
  %603 = vmatprep.subr.mxu0 0.0
  %604 = vmatpush1.msra.mxu0 0.0
  %605 = vmatprep.subr.mxu0 0.0
  %606 = vmatpush1.msra.mxu0 0.0
  %607 = vmatprep.subr.mxu0 0.0
  %608 = vmatpush1.msra.mxu0 0.0
  %609 = vmatprep.subr.mxu0 0.0
  %610 = vmatpush1.msra.mxu0 0.0
  %611 = vmatprep.subr.mxu0 0.0
  %612 = vmatpush1.msra.mxu0 0.0
  %613 = vmatprep.subr.mxu0 0.0
  %614 = vmatpush1.msra.mxu0 0.0
  %615 = vmatprep.subr.mxu0 0.0
  %616 = vmatpush1.msra.mxu0 0.0
  %617 = vmatprep.subr.mxu0 0.0
  %618 = vmatpush1.msra.mxu0 0.0
  %619 = vmatprep.subr.mxu0 0.0
  %620 = vmatpush1.msra.mxu0 0.0
  %621 = vmatprep.subr.mxu0 0.0
  %622 = vmatpush1.msra.mxu0 0.0
  %623 = vmatprep.subr.mxu0 0.0
  %624 = vmatpush1.msra.mxu0 0.0
  %625 = vmatprep.subr.mxu0 0.0
  %626 = vmatpush1.msra.mxu0 0.0
  %627 = vmatprep.subr.mxu0 0.0
  %628 = vmatpush1.msra.mxu0 0.0
  %629 = vmatprep.subr.mxu0 0.0
  %630 = vmatpush1.msra.mxu0 %v30
  %631 = vmatprep.subr.mxu0 0.0
  %632 = vmatpush1.msra.mxu0 %v29
  %633 = vmatprep.subr.mxu0 0.0
  %634 = vmatpush2.msra.mxu0 0.0
  %635 = vmatprep.subr.mxu0 0.0
  %636 = vmatpush2.msra.mxu0 0.0
  %637 = vmatprep.subr.mxu0 0.0
  %638 = vmatpush2.msra.mxu0 0.0
  %639 = vmatprep.subr.mxu0 0.0
  %640 = vmatpush2.msra.mxu0 0.0
  %641 = vmatprep.subr.mxu0 0.0
  %642 = vmatpush2.msra.mxu0 0.0
  %643 = vmatprep.subr.mxu0 0.0
  %644 = vmatpush2.msra.mxu0 0.0
  %645 = vmatprep.subr.mxu0 0.0
  %646 = vmatpush2.msra.mxu0 0.0
  %647 = vmatprep.subr.mxu0 0.0
  %648 = vmatpush2.msra.mxu0 0.0
  %649 = vmatprep.subr.mxu0 0.0
  %650 = vmatpush2.msra.mxu0 0.0
  %651 = vmatprep.subr.mxu0 0.0
  %652 = vmatpush2.msra.mxu0 0.0
  %653 = vmatprep.subr.mxu0 0.0
  %654 = vmatpush2.msra.mxu0 0.0
  %655 = vmatprep.subr.mxu0 0.0
  %656 = vmatpush2.msra.mxu0 0.0
  %657 = vmatprep.subr.mxu0 0.0
  %658 = vmatpush2.msra.mxu0 0.0
  %659 = vmatprep.subr.mxu0 0.0
  %660 = vmatpush2.msra.mxu0 0.0
  %661 = vmatprep.subr.mxu0 0.0
  %662 = vmatpush2.msra.mxu0 0.0
  %663 = vmatprep.subr.mxu0 0.0
  %664 = vmatpush2.msra.mxu0 0.0
  %665 = vmatprep.mubr.f32.mxu0 0.0
  %666 = vmatmul.mubr.f32.gmra.mxu0 %v599
  %v667 = vpop.f32.mrf.mxu0
  %v668 = vadd.f32 0.0, %v667
  %v669 = vpop.f32.mrf.mxu0
  %670 = vdwg.mxu0
  %v671 = vadd.f32 %v157, %v668
  %v672 = vxor.u32 %v671, 2147483648
  %v673 = vmul.f32 %v672, 1.442695
  %v674 = vpow.pop %v673
  %v675 = vadd.f32 %v674, 1.0
  %v676 = vrcp.pop %v675
  %v677 = vmul.f32 1.0, %v676
  %v678 = vtanh.pop %v671
  %v679 = vmul.f32 %v677, %v485
  %681 = vrot.lane.b32.xlu0 %v678, 96
  %v682 = vpop.permute.xlu0 %681
  %v684 = vmul.f32 %v677, %v682
  %686 = vrot.lane.b32.xlu0 %v684, 16
  %v687 = vpop.permute.xlu0 %686
  %v689 = vadd.f32 %v679, %v687
  %v690 = vtanh.pop %v689
  %692 = vrot.lane.b32.xlu0 %v690, 32
  %v693 = vpop.permute.xlu0 %692
  %v695 = vmul.f32 %v677, %v693
  %697 = vrot.lane.b32.xlu0 %v695, 80
  %v698 = vpop.permute.xlu0 %697
  %701 = vrot.lane.b32.xlu0 %v598, 96
  %v702 = vpop.permute.xlu0 %701
  %v704 = vsel %vm192, %v698, %v702
  %v706 = vsel %vm296, %v704, 0
  %708 = vmatprep.subr.mxu0 0.0
  %709 = vmatpush1.msra.mxu0 0.0
  %710 = vmatprep.subr.mxu0 0.0
  %711 = vmatpush1.msra.mxu0 0.0
  %712 = vmatprep.subr.mxu0 0.0
  %713 = vmatpush1.msra.mxu0 0.0
  %714 = vmatprep.subr.mxu0 0.0
  %715 = vmatpush1.msra.mxu0 0.0
  %716 = vmatprep.subr.mxu0 0.0
  %717 = vmatpush1.msra.mxu0 0.0
  %718 = vmatprep.subr.mxu0 0.0
  %719 = vmatpush1.msra.mxu0 0.0
  %720 = vmatprep.subr.mxu0 0.0
  %721 = vmatpush1.msra.mxu0 0.0
  %722 = vmatprep.subr.mxu0 0.0
  %723 = vmatpush1.msra.mxu0 0.0
  %724 = vmatprep.subr.mxu0 0.0
  %725 = vmatpush1.msra.mxu0 0.0
  %726 = vmatprep.subr.mxu0 0.0
  %727 = vmatpush1.msra.mxu0 0.0
  %728 = vmatprep.subr.mxu0 0.0
  %729 = vmatpush1.msra.mxu0 0.0
  %730 = vmatprep.subr.mxu0 0.0
  %731 = vmatpush1.msra.mxu0 0.0
  %732 = vmatprep.subr.mxu0 0.0
  %733 = vmatpush1.msra.mxu0 %v34
  %734 = vmatprep.subr.mxu0 0.0
  %735 = vmatpush1.msra.mxu0 %v33
  %736 = vmatprep.subr.mxu0 0.0
  %737 = vmatpush1.msra.mxu0 %v32
  %738 = vmatprep.subr.mxu0 0.0
  %739 = vmatpush1.msra.mxu0 %v31
  %740 = vmatprep.subr.mxu0 0.0
  %741 = vmatpush2.msra.mxu0 0.0
  %742 = vmatprep.subr.mxu0 0.0
  %743 = vmatpush2.msra.mxu0 0.0
  %744 = vmatprep.subr.mxu0 0.0
  %745 = vmatpush2.msra.mxu0 0.0
  %746 = vmatprep.subr.mxu0 0.0
  %747 = vmatpush2.msra.mxu0 0.0
  %748 = vmatprep.subr.mxu0 0.0
  %749 = vmatpush2.msra.mxu0 0.0
  %750 = vmatprep.subr.mxu0 0.0
  %751 = vmatpush2.msra.mxu0 0.0
  %752 = vmatprep.subr.mxu0 0.0
  %753 = vmatpush2.msra.mxu0 0.0
  %754 = vmatprep.subr.mxu0 0.0
  %755 = vmatpush2.msra.mxu0 0.0
  %756 = vmatprep.subr.mxu0 0.0
  %757 = vmatpush2.msra.mxu0 0.0
  %758 = vmatprep.subr.mxu0 0.0
  %759 = vmatpush2.msra.mxu0 0.0
  %760 = vmatprep.subr.mxu0 0.0
  %761 = vmatpush2.msra.mxu0 0.0
  %762 = vmatprep.subr.mxu0 0.0
  %763 = vmatpush2.msra.mxu0 0.0
  %764 = vmatprep.subr.mxu0 0.0
  %765 = vmatpush2.msra.mxu0 0.0
  %766 = vmatprep.subr.mxu0 0.0
  %767 = vmatpush2.msra.mxu0 0.0
  %768 = vmatprep.subr.mxu0 0.0
  %769 = vmatpush2.msra.mxu0 0.0
  %770 = vmatprep.subr.mxu0 0.0
  %771 = vmatpush2.msra.mxu0 0.0
  %772 = vmatprep.mubr.f32.mxu0 0.0
  %773 = vmatmul.mubr.f32.gmra.mxu0 %v706
  %v774 = vpop.f32.mrf.mxu0
  %v775 = vadd.f32 0.0, %v774
  %v776 = vpop.f32.mrf.mxu0
  %777 = vdwg.mxu0
  %v778 = vadd.f32 %v190, %v775
  %v779 = vxor.u32 %v778, 2147483648
  %v780 = vmul.f32 %v779, 1.442695
  %v781 = vpow.pop %v780
  %v782 = vadd.f32 %v781, 1.0
  %v783 = vrcp.pop %v782
  %v784 = vmul.f32 1.0, %v783
  %v785 = vtanh.pop %v778
  %v786 = vmul.f32 %v784, %v592
  %788 = vrot.lane.b32.xlu0 %v785, 96
  %v789 = vpop.permute.xlu0 %788
  %v791 = vmul.f32 %v784, %v789
  %793 = vrot.lane.b32.xlu0 %v791, 16
  %v794 = vpop.permute.xlu0 %793
  %v796 = vadd.f32 %v786, %v794
  %v797 = vtanh.pop %v796
  %799 = vrot.lane.b32.xlu0 %v797, 32
  %v800 = vpop.permute.xlu0 %799
  %v802 = vmul.f32 %v784, %v800
  %v803 = vsel %vm192, %v698, 0
  %805 = vmatprep.subr.mxu0 0.0
  %806 = vmatpush1.msra.mxu0 0.0
  %807 = vmatprep.subr.mxu0 0.0
  %808 = vmatpush1.msra.mxu0 0.0
  %809 = vmatprep.subr.mxu0 0.0
  %810 = vmatpush1.msra.mxu0 0.0
  %811 = vmatprep.subr.mxu0 0.0
  %812 = vmatpush1.msra.mxu0 0.0
  %813 = vmatprep.subr.mxu0 0.0
  %814 = vmatpush1.msra.mxu0 0.0
  %815 = vmatprep.subr.mxu0 0.0
  %816 = vmatpush1.msra.mxu0 0.0
  %817 = vmatprep.subr.mxu0 0.0
  %818 = vmatpush1.msra.mxu0 0.0
  %819 = vmatprep.subr.mxu0 0.0
  %820 = vmatpush1.msra.mxu0 0.0
  %821 = vmatprep.subr.mxu0 0.0
  %822 = vmatpush1.msra.mxu0 0.0
  %823 = vmatprep.subr.mxu0 0.0
  %824 = vmatpush1.msra.mxu0 0.0
  %825 = vmatprep.subr.mxu0 0.0
  %826 = vmatpush1.msra.mxu0 0.0
  %827 = vmatprep.subr.mxu0 0.0
  %828 = vmatpush1.msra.mxu0 0.0
  %829 = vmatprep.subr.mxu0 0.0
  %830 = vmatpush1.msra.mxu0 0.0
  %831 = vmatprep.subr.mxu0 0.0
  %832 = vmatpush1.msra.mxu0 0.0
  %833 = vmatprep.subr.mxu0 0.0
  %834 = vmatpush1.msra.mxu0 %v30
  %835 = vmatprep.subr.mxu0 0.0
  %836 = vmatpush1.msra.mxu0 %v29
  %837 = vmatprep.subr.mxu0 0.0
  %838 = vmatpush2.msra.mxu0 0.0
  %839 = vmatprep.subr.mxu0 0.0
  %840 = vmatpush2.msra.mxu0 0.0
  %841 = vmatprep.subr.mxu0 0.0
  %842 = vmatpush2.msra.mxu0 0.0
  %843 = vmatprep.subr.mxu0 0.0
  %844 = vmatpush2.msra.mxu0 0.0
  %845 = vmatprep.subr.mxu0 0.0
  %846 = vmatpush2.msra.mxu0 0.0
  %847 = vmatprep.subr.mxu0 0.0
  %848 = vmatpush2.msra.mxu0 0.0
  %849 = vmatprep.subr.mxu0 0.0
  %850 = vmatpush2.msra.mxu0 0.0
  %851 = vmatprep.subr.mxu0 0.0
  %852 = vmatpush2.msra.mxu0 0.0
  %853 = vmatprep.subr.mxu0 0.0
  %854 = vmatpush2.msra.mxu0 0.0
  %855 = vmatprep.subr.mxu0 0.0
  %856 = vmatpush2.msra.mxu0 0.0
  %857 = vmatprep.subr.mxu0 0.0
  %858 = vmatpush2.msra.mxu0 0.0
  %859 = vmatprep.subr.mxu0 0.0
  %860 = vmatpush2.msra.mxu0 0.0
  %861 = vmatprep.subr.mxu0 0.0
  %862 = vmatpush2.msra.mxu0 0.0
  %863 = vmatprep.subr.mxu0 0.0
  %864 = vmatpush2.msra.mxu0 0.0
  %865 = vmatprep.subr.mxu0 0.0
  %866 = vmatpush2.msra.mxu0 0.0
  %867 = vmatprep.subr.mxu0 0.0
  %868 = vmatpush2.msra.mxu0 0.0
  %869 = vmatprep.mubr.f32.mxu0 0.0
  %870 = vmatmul.mubr.f32.gmra.mxu0 %v803
  %v871 = vpop.f32.mrf.mxu0
  %v872 = vadd.f32 0.0, %v871
  %v873 = vpop.f32.mrf.mxu0
  %874 = vdwg.mxu0
  %v875 = vadd.f32 %v162, %v872
  %v876 = vxor.u32 %v875, 2147483648
  %v877 = vmul.f32 %v876, 1.442695
  %v878 = vpow.pop %v877
  %v879 = vadd.f32 %v878, 1.0
  %v880 = vrcp.pop %v879
  %v881 = vmul.f32 1.0, %v880
  %v882 = vtanh.pop %v875
  %v883 = vmul.f32 %v881, %v689
  %885 = vrot.lane.b32.xlu0 %v882, 96
  %v886 = vpop.permute.xlu0 %885
  %v888 = vmul.f32 %v881, %v886
  %890 = vrot.lane.b32.xlu0 %v888, 16
  %v891 = vpop.permute.xlu0 %890
  %v893 = vadd.f32 %v883, %v891
  %v894 = vtanh.pop %v893
  %896 = vrot.lane.b32.xlu0 %v894, 32
  %v897 = vpop.permute.xlu0 %896
  %v899 = vmul.f32 %v881, %v897
  %901 = vrot.lane.b32.xlu0 %v899, 80
  %v902 = vpop.permute.xlu0 %901
  %905 = vrot.lane.b32.xlu0 %v802, 96
  %v906 = vpop.permute.xlu0 %905
  %v908 = vsel %vm192, %v902, %v906
  %v910 = vsel %vm296, %v908, 0
  %912 = vmatprep.subr.mxu0 0.0
  %913 = vmatpush1.msra.mxu0 0.0
  %914 = vmatprep.subr.mxu0 0.0
  %915 = vmatpush1.msra.mxu0 0.0
  %916 = vmatprep.subr.mxu0 0.0
  %917 = vmatpush1.msra.mxu0 0.0
  %918 = vmatprep.subr.mxu0 0.0
  %919 = vmatpush1.msra.mxu0 0.0
  %920 = vmatprep.subr.mxu0 0.0
  %921 = vmatpush1.msra.mxu0 0.0
  %922 = vmatprep.subr.mxu0 0.0
  %923 = vmatpush1.msra.mxu0 0.0
  %924 = vmatprep.subr.mxu0 0.0
  %925 = vmatpush1.msra.mxu0 0.0
  %926 = vmatprep.subr.mxu0 0.0
  %927 = vmatpush1.msra.mxu0 0.0
  %928 = vmatprep.subr.mxu0 0.0
  %929 = vmatpush1.msra.mxu0 0.0
  %930 = vmatprep.subr.mxu0 0.0
  %931 = vmatpush1.msra.mxu0 0.0
  %932 = vmatprep.subr.mxu0 0.0
  %933 = vmatpush1.msra.mxu0 0.0
  %934 = vmatprep.subr.mxu0 0.0
  %935 = vmatpush1.msra.mxu0 0.0
  %936 = vmatprep.subr.mxu0 0.0
  %937 = vmatpush1.msra.mxu0 %v34
  %938 = vmatprep.subr.mxu0 0.0
  %939 = vmatpush1.msra.mxu0 %v33
  %940 = vmatprep.subr.mxu0 0.0
  %941 = vmatpush1.msra.mxu0 %v32
  %942 = vmatprep.subr.mxu0 0.0
  %943 = vmatpush1.msra.mxu0 %v31
  %944 = vmatprep.subr.mxu0 0.0
  %945 = vmatpush2.msra.mxu0 0.0
  %946 = vmatprep.subr.mxu0 0.0
  %947 = vmatpush2.msra.mxu0 0.0
  %948 = vmatprep.subr.mxu0 0.0
  %949 = vmatpush2.msra.mxu0 0.0
  %950 = vmatprep.subr.mxu0 0.0
  %951 = vmatpush2.msra.mxu0 0.0
  %952 = vmatprep.subr.mxu0 0.0
  %953 = vmatpush2.msra.mxu0 0.0
  %954 = vmatprep.subr.mxu0 0.0
  %955 = vmatpush2.msra.mxu0 0.0
  %956 = vmatprep.subr.mxu0 0.0
  %957 = vmatpush2.msra.mxu0 0.0
  %958 = vmatprep.subr.mxu0 0.0
  %959 = vmatpush2.msra.mxu0 0.0
  %960 = vmatprep.subr.mxu0 0.0
  %961 = vmatpush2.msra.mxu0 0.0
  %962 = vmatprep.subr.mxu0 0.0
  %963 = vmatpush2.msra.mxu0 0.0
  %964 = vmatprep.subr.mxu0 0.0
  %965 = vmatpush2.msra.mxu0 0.0
  %966 = vmatprep.subr.mxu0 0.0
  %967 = vmatpush2.msra.mxu0 0.0
  %968 = vmatprep.subr.mxu0 0.0
  %969 = vmatpush2.msra.mxu0 0.0
  %970 = vmatprep.subr.mxu0 0.0
  %971 = vmatpush2.msra.mxu0 0.0
  %972 = vmatprep.subr.mxu0 0.0
  %973 = vmatpush2.msra.mxu0 0.0
  %974 = vmatprep.subr.mxu0 0.0
  %975 = vmatpush2.msra.mxu0 0.0
  %976 = vmatprep.mubr.f32.mxu0 0.0
  %977 = vmatmul.mubr.f32.gmra.mxu0 %v910
  %v978 = vpop.f32.mrf.mxu0
  %v979 = vadd.f32 0.0, %v978
  %v980 = vpop.f32.mrf.mxu0
  %981 = vdwg.mxu0
  %v982 = vadd.f32 %v190, %v979
  %v983 = vxor.u32 %v982, 2147483648
  %v984 = vmul.f32 %v983, 1.442695
  %v985 = vpow.pop %v984
  %v986 = vadd.f32 %v985, 1.0
  %v987 = vrcp.pop %v986
  %v988 = vmul.f32 1.0, %v987
  %v989 = vtanh.pop %v982
  %v990 = vmul.f32 %v988, %v796
  %992 = vrot.lane.b32.xlu0 %v989, 96
  %v993 = vpop.permute.xlu0 %992
  %v995 = vmul.f32 %v988, %v993
  %997 = vrot.lane.b32.xlu0 %v995, 16
  %v998 = vpop.permute.xlu0 %997
  %v1000 = vadd.f32 %v990, %v998
  %v1001 = vtanh.pop %v1000
  %1003 = vrot.lane.b32.xlu0 %v1001, 32
  %v1004 = vpop.permute.xlu0 %1003
  %v1006 = vmul.f32 %v988, %v1004
  %v1007 = vsel %vm192, %v902, 0
  %1009 = vmatprep.subr.mxu0 0.0
  %1010 = vmatpush1.msra.mxu0 0.0
  %1011 = vmatprep.subr.mxu0 0.0
  %1012 = vmatpush1.msra.mxu0 0.0
  %1013 = vmatprep.subr.mxu0 0.0
  %1014 = vmatpush1.msra.mxu0 0.0
  %1015 = vmatprep.subr.mxu0 0.0
  %1016 = vmatpush1.msra.mxu0 0.0
  %1017 = vmatprep.subr.mxu0 0.0
  %1018 = vmatpush1.msra.mxu0 0.0
  %1019 = vmatprep.subr.mxu0 0.0
  %1020 = vmatpush1.msra.mxu0 0.0
  %1021 = vmatprep.subr.mxu0 0.0
  %1022 = vmatpush1.msra.mxu0 0.0
  %1023 = vmatprep.subr.mxu0 0.0
  %1024 = vmatpush1.msra.mxu0 0.0
  %1025 = vmatprep.subr.mxu0 0.0
  %1026 = vmatpush1.msra.mxu0 0.0
  %1027 = vmatprep.subr.mxu0 0.0
  %1028 = vmatpush1.msra.mxu0 0.0
  %1029 = vmatprep.subr.mxu0 0.0
  %1030 = vmatpush1.msra.mxu0 0.0
  %1031 = vmatprep.subr.mxu0 0.0
  %1032 = vmatpush1.msra.mxu0 0.0
  %1033 = vmatprep.subr.mxu0 0.0
  %1034 = vmatpush1.msra.mxu0 0.0
  %1035 = vmatprep.subr.mxu0 0.0
  %1036 = vmatpush1.msra.mxu0 0.0
  %1037 = vmatprep.subr.mxu0 0.0
  %1038 = vmatpush1.msra.mxu0 %v30
  %1039 = vmatprep.subr.mxu0 0.0
  %1040 = vmatpush1.msra.mxu0 %v29
  %1041 = vmatprep.subr.mxu0 0.0
  %1042 = vmatpush2.msra.mxu0 0.0
  %1043 = vmatprep.subr.mxu0 0.0
  %1044 = vmatpush2.msra.mxu0 0.0
  %1045 = vmatprep.subr.mxu0 0.0
  %1046 = vmatpush2.msra.mxu0 0.0
  %1047 = vmatprep.subr.mxu0 0.0
  %1048 = vmatpush2.msra.mxu0 0.0
  %1049 = vmatprep.subr.mxu0 0.0
  %1050 = vmatpush2.msra.mxu0 0.0
  %1051 = vmatprep.subr.mxu0 0.0
  %1052 = vmatpush2.msra.mxu0 0.0
  %1053 = vmatprep.subr.mxu0 0.0
  %1054 = vmatpush2.msra.mxu0 0.0
  %1055 = vmatprep.subr.mxu0 0.0
  %1056 = vmatpush2.msra.mxu0 0.0
  %1057 = vmatprep.subr.mxu0 0.0
  %1058 = vmatpush2.msra.mxu0 0.0
  %1059 = vmatprep.subr.mxu0 0.0
  %1060 = vmatpush2.msra.mxu0 0.0
  %1061 = vmatprep.subr.mxu0 0.0
  %1062 = vmatpush2.msra.mxu0 0.0
  %1063 = vmatprep.subr.mxu0 0.0
  %1064 = vmatpush2.msra.mxu0 0.0
  %1065 = vmatprep.subr.mxu0 0.0
  %1066 = vmatpush2.msra.mxu0 0.0
  %1067 = vmatprep.subr.mxu0 0.0
  %1068 = vmatpush2.msra.mxu0 0.0
  %1069 = vmatprep.subr.mxu0 0.0
  %1070 = vmatpush2.msra.mxu0 0.0
  %1071 = vmatprep.subr.mxu0 0.0
  %1072 = vmatpush2.msra.mxu0 0.0
  %1073 = vmatprep.mubr.f32.mxu0 0.0
  %1074 = vmatmul.mubr.f32.gmra.mxu0 %v1007
  %v1075 = vpop.f32.mrf.mxu0
  %v1076 = vadd.f32 0.0, %v1075
  %v1077 = vpop.f32.mrf.mxu0
  %1078 = vdwg.mxu0
  %v1079 = vadd.f32 %v167, %v1076
  %v1080 = vxor.u32 %v1079, 2147483648
  %v1081 = vmul.f32 %v1080, 1.442695
  %v1082 = vpow.pop %v1081
  %v1083 = vadd.f32 %v1082, 1.0
  %v1084 = vrcp.pop %v1083
  %v1085 = vmul.f32 1.0, %v1084
  %v1086 = vtanh.pop %v1079
  %v1087 = vmul.f32 %v1085, %v893
  %1089 = vrot.lane.b32.xlu0 %v1086, 96
  %v1090 = vpop.permute.xlu0 %1089
  %v1092 = vmul.f32 %v1085, %v1090
  %1094 = vrot.lane.b32.xlu0 %v1092, 16
  %v1095 = vpop.permute.xlu0 %1094
  %v1097 = vadd.f32 %v1087, %v1095
  %v1098 = vtanh.pop %v1097
  %1100 = vrot.lane.b32.xlu0 %v1098, 32
  %v1101 = vpop.permute.xlu0 %1100
  %v1103 = vmul.f32 %v1085, %v1101
  %1105 = vrot.lane.b32.xlu0 %v1103, 80
  %v1106 = vpop.permute.xlu0 %1105
  %1109 = vrot.lane.b32.xlu0 %v1006, 96
  %v1110 = vpop.permute.xlu0 %1109
  %v1112 = vsel %vm192, %v1106, %v1110
  %v1114 = vsel %vm296, %v1112, 0
  %1116 = vmatprep.subr.mxu0 0.0
  %1117 = vmatpush1.msra.mxu0 0.0
  %1118 = vmatprep.subr.mxu0 0.0
  %1119 = vmatpush1.msra.mxu0 0.0
  %1120 = vmatprep.subr.mxu0 0.0
  %1121 = vmatpush1.msra.mxu0 0.0
  %1122 = vmatprep.subr.mxu0 0.0
  %1123 = vmatpush1.msra.mxu0 0.0
  %1124 = vmatprep.subr.mxu0 0.0
  %1125 = vmatpush1.msra.mxu0 0.0
  %1126 = vmatprep.subr.mxu0 0.0
  %1127 = vmatpush1.msra.mxu0 0.0
  %1128 = vmatprep.subr.mxu0 0.0
  %1129 = vmatpush1.msra.mxu0 0.0
  %1130 = vmatprep.subr.mxu0 0.0
  %1131 = vmatpush1.msra.mxu0 0.0
  %1132 = vmatprep.subr.mxu0 0.0
  %1133 = vmatpush1.msra.mxu0 0.0
  %1134 = vmatprep.subr.mxu0 0.0
  %1135 = vmatpush1.msra.mxu0 0.0
  %1136 = vmatprep.subr.mxu0 0.0
  %1137 = vmatpush1.msra.mxu0 0.0
  %1138 = vmatprep.subr.mxu0 0.0
  %1139 = vmatpush1.msra.mxu0 0.0
  %1140 = vmatprep.subr.mxu0 0.0
  %1141 = vmatpush1.msra.mxu0 %v34
  %1142 = vmatprep.subr.mxu0 0.0
  %1143 = vmatpush1.msra.mxu0 %v33
  %1144 = vmatprep.subr.mxu0 0.0
  %1145 = vmatpush1.msra.mxu0 %v32
  %1146 = vmatprep.subr.mxu0 0.0
  %1147 = vmatpush1.msra.mxu0 %v31
  %1148 = vmatprep.subr.mxu0 0.0
  %1149 = vmatpush2.msra.mxu0 0.0
  %1150 = vmatprep.subr.mxu0 0.0
  %1151 = vmatpush2.msra.mxu0 0.0
  %1152 = vmatprep.subr.mxu0 0.0
  %1153 = vmatpush2.msra.mxu0 0.0
  %1154 = vmatprep.subr.mxu0 0.0
  %1155 = vmatpush2.msra.mxu0 0.0
  %1156 = vmatprep.subr.mxu0 0.0
  %1157 = vmatpush2.msra.mxu0 0.0
  %1158 = vmatprep.subr.mxu0 0.0
  %1159 = vmatpush2.msra.mxu0 0.0
  %1160 = vmatprep.subr.mxu0 0.0
  %1161 = vmatpush2.msra.mxu0 0.0
  %1162 = vmatprep.subr.mxu0 0.0
  %1163 = vmatpush2.msra.mxu0 0.0
  %1164 = vmatprep.subr.mxu0 0.0
  %1165 = vmatpush2.msra.mxu0 0.0
  %1166 = vmatprep.subr.mxu0 0.0
  %1167 = vmatpush2.msra.mxu0 0.0
  %1168 = vmatprep.subr.mxu0 0.0
  %1169 = vmatpush2.msra.mxu0 0.0
  %1170 = vmatprep.subr.mxu0 0.0
  %1171 = vmatpush2.msra.mxu0 0.0
  %1172 = vmatprep.subr.mxu0 0.0
  %1173 = vmatpush2.msra.mxu0 0.0
  %1174 = vmatprep.subr.mxu0 0.0
  %1175 = vmatpush2.msra.mxu0 0.0
  %1176 = vmatprep.subr.mxu0 0.0
  %1177 = vmatpush2.msra.mxu0 0.0
  %1178 = vmatprep.subr.mxu0 0.0
  %1179 = vmatpush2.msra.mxu0 0.0
  %1180 = vmatprep.mubr.f32.mxu0 0.0
  %1181 = vmatmul.mubr.f32.gmra.mxu0 %v1114
  %v1182 = vpop.f32.mrf.mxu0
  %v1183 = vadd.f32 0.0, %v1182
  %v1184 = vpop.f32.mrf.mxu0
  %1185 = vdwg.mxu0
  %v1186 = vadd.f32 %v190, %v1183
  %v1187 = vxor.u32 %v1186, 2147483648
  %v1188 = vmul.f32 %v1187, 1.442695
  %v1189 = vpow.pop %v1188
  %v1190 = vadd.f32 %v1189, 1.0
  %v1191 = vrcp.pop %v1190
  %v1192 = vmul.f32 1.0, %v1191
  %v1193 = vtanh.pop %v1186
  %v1194 = vmul.f32 %v1192, %v1000
  %1196 = vrot.lane.b32.xlu0 %v1193, 96
  %v1197 = vpop.permute.xlu0 %1196
  %v1199 = vmul.f32 %v1192, %v1197
  %1201 = vrot.lane.b32.xlu0 %v1199, 16
  %v1202 = vpop.permute.xlu0 %1201
  %v1204 = vadd.f32 %v1194, %v1202
  %v1205 = vtanh.pop %v1204
  %1207 = vrot.lane.b32.xlu0 %v1205, 32
  %v1208 = vpop.permute.xlu0 %1207
  %v1210 = vmul.f32 %v1192, %v1208
  %v1211 = vsel %vm192, %v1106, 0
  %1213 = vmatprep.subr.mxu0 0.0
  %1214 = vmatpush1.msra.mxu0 0.0
  %1215 = vmatprep.subr.mxu0 0.0
  %1216 = vmatpush1.msra.mxu0 0.0
  %1217 = vmatprep.subr.mxu0 0.0
  %1218 = vmatpush1.msra.mxu0 0.0
  %1219 = vmatprep.subr.mxu0 0.0
  %1220 = vmatpush1.msra.mxu0 0.0
  %1221 = vmatprep.subr.mxu0 0.0
  %1222 = vmatpush1.msra.mxu0 0.0
  %1223 = vmatprep.subr.mxu0 0.0
  %1224 = vmatpush1.msra.mxu0 0.0
  %1225 = vmatprep.subr.mxu0 0.0
  %1226 = vmatpush1.msra.mxu0 0.0
  %1227 = vmatprep.subr.mxu0 0.0
  %1228 = vmatpush1.msra.mxu0 0.0
  %1229 = vmatprep.subr.mxu0 0.0
  %1230 = vmatpush1.msra.mxu0 0.0
  %1231 = vmatprep.subr.mxu0 0.0
  %1232 = vmatpush1.msra.mxu0 0.0
  %1233 = vmatprep.subr.mxu0 0.0
  %1234 = vmatpush1.msra.mxu0 0.0
  %1235 = vmatprep.subr.mxu0 0.0
  %1236 = vmatpush1.msra.mxu0 0.0
  %1237 = vmatprep.subr.mxu0 0.0
  %1238 = vmatpush1.msra.mxu0 0.0
  %1239 = vmatprep.subr.mxu0 0.0
  %1240 = vmatpush1.msra.mxu0 0.0
  %1241 = vmatprep.subr.mxu0 0.0
  %1242 = vmatpush1.msra.mxu0 %v30
  %1243 = vmatprep.subr.mxu0 0.0
  %1244 = vmatpush1.msra.mxu0 %v29
  %1245 = vmatprep.subr.mxu0 0.0
  %1246 = vmatpush2.msra.mxu0 0.0
  %1247 = vmatprep.subr.mxu0 0.0
  %1248 = vmatpush2.msra.mxu0 0.0
  %1249 = vmatprep.subr.mxu0 0.0
  %1250 = vmatpush2.msra.mxu0 0.0
  %1251 = vmatprep.subr.mxu0 0.0
  %1252 = vmatpush2.msra.mxu0 0.0
  %1253 = vmatprep.subr.mxu0 0.0
  %1254 = vmatpush2.msra.mxu0 0.0
  %1255 = vmatprep.subr.mxu0 0.0
  %1256 = vmatpush2.msra.mxu0 0.0
  %1257 = vmatprep.subr.mxu0 0.0
  %1258 = vmatpush2.msra.mxu0 0.0
  %1259 = vmatprep.subr.mxu0 0.0
  %1260 = vmatpush2.msra.mxu0 0.0
  %1261 = vmatprep.subr.mxu0 0.0
  %1262 = vmatpush2.msra.mxu0 0.0
  %1263 = vmatprep.subr.mxu0 0.0
  %1264 = vmatpush2.msra.mxu0 0.0
  %1265 = vmatprep.subr.mxu0 0.0
  %1266 = vmatpush2.msra.mxu0 0.0
  %1267 = vmatprep.subr.mxu0 0.0
  %1268 = vmatpush2.msra.mxu0 0.0
  %1269 = vmatprep.subr.mxu0 0.0
  %1270 = vmatpush2.msra.mxu0 0.0
  %1271 = vmatprep.subr.mxu0 0.0
  %1272 = vmatpush2.msra.mxu0 0.0
  %1273 = vmatprep.subr.mxu0 0.0
  %1274 = vmatpush2.msra.mxu0 0.0
  %1275 = vmatprep.subr.mxu0 0.0
  %1276 = vmatpush2.msra.mxu0 0.0
  %1277 = vmatprep.mubr.f32.mxu0 0.0
  %1278 = vmatmul.mubr.f32.gmra.mxu0 %v1211
  %v1279 = vpop.f32.mrf.mxu0
  %v1280 = vadd.f32 0.0, %v1279
  %v1281 = vpop.f32.mrf.mxu0
  %1282 = vdwg.mxu0
  %v1283 = vadd.f32 %v172, %v1280
  %v1284 = vxor.u32 %v1283, 2147483648
  %v1285 = vmul.f32 %v1284, 1.442695
  %v1286 = vpow.pop %v1285
  %v1287 = vadd.f32 %v1286, 1.0
  %v1288 = vrcp.pop %v1287
  %v1289 = vmul.f32 1.0, %v1288
  %v1290 = vtanh.pop %v1283
  %v1291 = vmul.f32 %v1289, %v1097
  %1293 = vrot.lane.b32.xlu0 %v1290, 96
  %v1294 = vpop.permute.xlu0 %1293
  %v1296 = vmul.f32 %v1289, %v1294
  %1298 = vrot.lane.b32.xlu0 %v1296, 16
  %v1299 = vpop.permute.xlu0 %1298
  %v1301 = vadd.f32 %v1291, %v1299
  %v1302 = vtanh.pop %v1301
  %1304 = vrot.lane.b32.xlu0 %v1302, 32
  %v1305 = vpop.permute.xlu0 %1304
  %v1307 = vmul.f32 %v1289, %v1305
  %1309 = vrot.lane.b32.xlu0 %v1307, 80
  %v1310 = vpop.permute.xlu0 %1309
  %1313 = vrot.lane.b32.xlu0 %v1210, 96
  %v1314 = vpop.permute.xlu0 %1313
  %v1316 = vsel %vm192, %v1310, %v1314
  %v1318 = vsel %vm296, %v1316, 0
  %1320 = vmatprep.subr.mxu0 0.0
  %1321 = vmatpush1.msra.mxu0 0.0
  %1322 = vmatprep.subr.mxu0 0.0
  %1323 = vmatpush1.msra.mxu0 0.0
  %1324 = vmatprep.subr.mxu0 0.0
  %1325 = vmatpush1.msra.mxu0 0.0
  %1326 = vmatprep.subr.mxu0 0.0
  %1327 = vmatpush1.msra.mxu0 0.0
  %1328 = vmatprep.subr.mxu0 0.0
  %1329 = vmatpush1.msra.mxu0 0.0
  %1330 = vmatprep.subr.mxu0 0.0
  %1331 = vmatpush1.msra.mxu0 0.0
  %1332 = vmatprep.subr.mxu0 0.0
  %1333 = vmatpush1.msra.mxu0 0.0
  %1334 = vmatprep.subr.mxu0 0.0
  %1335 = vmatpush1.msra.mxu0 0.0
  %1336 = vmatprep.subr.mxu0 0.0
  %1337 = vmatpush1.msra.mxu0 0.0
  %1338 = vmatprep.subr.mxu0 0.0
  %1339 = vmatpush1.msra.mxu0 0.0
  %1340 = vmatprep.subr.mxu0 0.0
  %1341 = vmatpush1.msra.mxu0 0.0
  %1342 = vmatprep.subr.mxu0 0.0
  %1343 = vmatpush1.msra.mxu0 0.0
  %1344 = vmatprep.subr.mxu0 0.0
  %1345 = vmatpush1.msra.mxu0 %v34
  %1346 = vmatprep.subr.mxu0 0.0
  %1347 = vmatpush1.msra.mxu0 %v33
  %1348 = vmatprep.subr.mxu0 0.0
  %1349 = vmatpush1.msra.mxu0 %v32
  %1350 = vmatprep.subr.mxu0 0.0
  %1351 = vmatpush1.msra.mxu0 %v31
  %1352 = vmatprep.subr.mxu0 0.0
  %1353 = vmatpush2.msra.mxu0 0.0
  %1354 = vmatprep.subr.mxu0 0.0
  %1355 = vmatpush2.msra.mxu0 0.0
  %1356 = vmatprep.subr.mxu0 0.0
  %1357 = vmatpush2.msra.mxu0 0.0
  %1358 = vmatprep.subr.mxu0 0.0
  %1359 = vmatpush2.msra.mxu0 0.0
  %1360 = vmatprep.subr.mxu0 0.0
  %1361 = vmatpush2.msra.mxu0 0.0
  %1362 = vmatprep.subr.mxu0 0.0
  %1363 = vmatpush2.msra.mxu0 0.0
  %1364 = vmatprep.subr.mxu0 0.0
  %1365 = vmatpush2.msra.mxu0 0.0
  %1366 = vmatprep.subr.mxu0 0.0
  %1367 = vmatpush2.msra.mxu0 0.0
  %1368 = vmatprep.subr.mxu0 0.0
  %1369 = vmatpush2.msra.mxu0 0.0
  %1370 = vmatprep.subr.mxu0 0.0
  %1371 = vmatpush2.msra.mxu0 0.0
  %1372 = vmatprep.subr.mxu0 0.0
  %1373 = vmatpush2.msra.mxu0 0.0
  %1374 = vmatprep.subr.mxu0 0.0
  %1375 = vmatpush2.msra.mxu0 0.0
  %1376 = vmatprep.subr.mxu0 0.0
  %1377 = vmatpush2.msra.mxu0 0.0
  %1378 = vmatprep.subr.mxu0 0.0
  %1379 = vmatpush2.msra.mxu0 0.0
  %1380 = vmatprep.subr.mxu0 0.0
  %1381 = vmatpush2.msra.mxu0 0.0
  %1382 = vmatprep.subr.mxu0 0.0
  %1383 = vmatpush2.msra.mxu0 0.0
  %1384 = vmatprep.mubr.f32.mxu0 0.0
  %1385 = vmatmul.mubr.f32.gmra.mxu0 %v1318
  %v1386 = vpop.f32.mrf.mxu0
  %v1387 = vadd.f32 0.0, %v1386
  %v1388 = vpop.f32.mrf.mxu0
  %1389 = vdwg.mxu0
  %v1390 = vadd.f32 %v190, %v1387
  %v1391 = vxor.u32 %v1390, 2147483648
  %v1392 = vmul.f32 %v1391, 1.442695
  %v1393 = vpow.pop %v1392
  %v1394 = vadd.f32 %v1393, 1.0
  %v1395 = vrcp.pop %v1394
  %v1396 = vmul.f32 1.0, %v1395
  %v1397 = vtanh.pop %v1390
  %v1398 = vmul.f32 %v1396, %v1204
  %1400 = vrot.lane.b32.xlu0 %v1397, 96
  %v1401 = vpop.permute.xlu0 %1400
  %v1403 = vmul.f32 %v1396, %v1401
  %1405 = vrot.lane.b32.xlu0 %v1403, 16
  %v1406 = vpop.permute.xlu0 %1405
  %v1408 = vadd.f32 %v1398, %v1406
  %v1409 = vtanh.pop %v1408
  %1411 = vrot.lane.b32.xlu0 %v1409, 32
  %v1412 = vpop.permute.xlu0 %1411
  %v1414 = vmul.f32 %v1396, %v1412
  %v1415 = vsel %vm192, %v1310, 0
  %1417 = vmatprep.subr.mxu0 0.0
  %1418 = vmatpush1.msra.mxu0 0.0
  %1419 = vmatprep.subr.mxu0 0.0
  %1420 = vmatpush1.msra.mxu0 0.0
  %1421 = vmatprep.subr.mxu0 0.0
  %1422 = vmatpush1.msra.mxu0 0.0
  %1423 = vmatprep.subr.mxu0 0.0
  %1424 = vmatpush1.msra.mxu0 0.0
  %1425 = vmatprep.subr.mxu0 0.0
  %1426 = vmatpush1.msra.mxu0 0.0
  %1427 = vmatprep.subr.mxu0 0.0
  %1428 = vmatpush1.msra.mxu0 0.0
  %1429 = vmatprep.subr.mxu0 0.0
  %1430 = vmatpush1.msra.mxu0 0.0
  %1431 = vmatprep.subr.mxu0 0.0
  %1432 = vmatpush1.msra.mxu0 0.0
  %1433 = vmatprep.subr.mxu0 0.0
  %1434 = vmatpush1.msra.mxu0 0.0
  %1435 = vmatprep.subr.mxu0 0.0
  %1436 = vmatpush1.msra.mxu0 0.0
  %1437 = vmatprep.subr.mxu0 0.0
  %1438 = vmatpush1.msra.mxu0 0.0
  %1439 = vmatprep.subr.mxu0 0.0
  %1440 = vmatpush1.msra.mxu0 0.0
  %1441 = vmatprep.subr.mxu0 0.0
  %1442 = vmatpush1.msra.mxu0 0.0
  %1443 = vmatprep.subr.mxu0 0.0
  %1444 = vmatpush1.msra.mxu0 0.0
  %1445 = vmatprep.subr.mxu0 0.0
  %1446 = vmatpush1.msra.mxu0 %v30
  %1447 = vmatprep.subr.mxu0 0.0
  %1448 = vmatpush1.msra.mxu0 %v29
  %1449 = vmatprep.subr.mxu0 0.0
  %1450 = vmatpush2.msra.mxu0 0.0
  %1451 = vmatprep.subr.mxu0 0.0
  %1452 = vmatpush2.msra.mxu0 0.0
  %1453 = vmatprep.subr.mxu0 0.0
  %1454 = vmatpush2.msra.mxu0 0.0
  %1455 = vmatprep.subr.mxu0 0.0
  %1456 = vmatpush2.msra.mxu0 0.0
  %1457 = vmatprep.subr.mxu0 0.0
  %1458 = vmatpush2.msra.mxu0 0.0
  %1459 = vmatprep.subr.mxu0 0.0
  %1460 = vmatpush2.msra.mxu0 0.0
  %1461 = vmatprep.subr.mxu0 0.0
  %1462 = vmatpush2.msra.mxu0 0.0
  %1463 = vmatprep.subr.mxu0 0.0
  %1464 = vmatpush2.msra.mxu0 0.0
  %1465 = vmatprep.subr.mxu0 0.0
  %1466 = vmatpush2.msra.mxu0 0.0
  %1467 = vmatprep.subr.mxu0 0.0
  %1468 = vmatpush2.msra.mxu0 0.0
  %1469 = vmatprep.subr.mxu0 0.0
  %1470 = vmatpush2.msra.mxu0 0.0
  %1471 = vmatprep.subr.mxu0 0.0
  %1472 = vmatpush2.msra.mxu0 0.0
  %1473 = vmatprep.subr.mxu0 0.0
  %1474 = vmatpush2.msra.mxu0 0.0
  %1475 = vmatprep.subr.mxu0 0.0
  %1476 = vmatpush2.msra.mxu0 0.0
  %1477 = vmatprep.subr.mxu0 0.0
  %1478 = vmatpush2.msra.mxu0 0.0
  %1479 = vmatprep.subr.mxu0 0.0
  %1480 = vmatpush2.msra.mxu0 0.0
  %1481 = vmatprep.mubr.f32.mxu0 0.0
  %1482 = vmatmul.mubr.f32.gmra.mxu0 %v1415
  %v1483 = vpop.f32.mrf.mxu0
  %v1484 = vadd.f32 0.0, %v1483
  %v1485 = vpop.f32.mrf.mxu0
  %1486 = vdwg.mxu0
  %v1487 = vadd.f32 %v177, %v1484
  %v1488 = vxor.u32 %v1487, 2147483648
  %v1489 = vmul.f32 %v1488, 1.442695
  %v1490 = vpow.pop %v1489
  %v1491 = vadd.f32 %v1490, 1.0
  %v1492 = vrcp.pop %v1491
  %v1493 = vmul.f32 1.0, %v1492
  %v1494 = vtanh.pop %v1487
  %v1495 = vmul.f32 %v1493, %v1301
  %1497 = vrot.lane.b32.xlu0 %v1494, 96
  %v1498 = vpop.permute.xlu0 %1497
  %v1500 = vmul.f32 %v1493, %v1498
  %1502 = vrot.lane.b32.xlu0 %v1500, 16
  %v1503 = vpop.permute.xlu0 %1502
  %v1505 = vadd.f32 %v1495, %v1503
  %v1506 = vtanh.pop %v1505
  %1508 = vrot.lane.b32.xlu0 %v1506, 32
  %v1509 = vpop.permute.xlu0 %1508
  %v1511 = vmul.f32 %v1493, %v1509
  %1513 = vrot.lane.b32.xlu0 %v1511, 80
  %v1514 = vpop.permute.xlu0 %1513
  %1517 = vrot.lane.b32.xlu0 %v1414, 96
  %v1518 = vpop.permute.xlu0 %1517
  %v1520 = vsel %vm192, %v1514, %v1518
  %v1522 = vsel %vm296, %v1520, 0
  %1524 = vmatprep.subr.mxu0 0.0
  %1525 = vmatpush1.msra.mxu0 0.0
  %1526 = vmatprep.subr.mxu0 0.0
  %1527 = vmatpush1.msra.mxu0 0.0
  %1528 = vmatprep.subr.mxu0 0.0
  %1529 = vmatpush1.msra.mxu0 0.0
  %1530 = vmatprep.subr.mxu0 0.0
  %1531 = vmatpush1.msra.mxu0 0.0
  %1532 = vmatprep.subr.mxu0 0.0
  %1533 = vmatpush1.msra.mxu0 0.0
  %1534 = vmatprep.subr.mxu0 0.0
  %1535 = vmatpush1.msra.mxu0 0.0
  %1536 = vmatprep.subr.mxu0 0.0
  %1537 = vmatpush1.msra.mxu0 0.0
  %1538 = vmatprep.subr.mxu0 0.0
  %1539 = vmatpush1.msra.mxu0 0.0
  %1540 = vmatprep.subr.mxu0 0.0
  %1541 = vmatpush1.msra.mxu0 0.0
  %1542 = vmatprep.subr.mxu0 0.0
  %1543 = vmatpush1.msra.mxu0 0.0
  %1544 = vmatprep.subr.mxu0 0.0
  %1545 = vmatpush1.msra.mxu0 0.0
  %1546 = vmatprep.subr.mxu0 0.0
  %1547 = vmatpush1.msra.mxu0 0.0
  %1548 = vmatprep.subr.mxu0 0.0
  %1549 = vmatpush1.msra.mxu0 %v34
  %1550 = vmatprep.subr.mxu0 0.0
  %1551 = vmatpush1.msra.mxu0 %v33
  %1552 = vmatprep.subr.mxu0 0.0
  %1553 = vmatpush1.msra.mxu0 %v32
  %1554 = vmatprep.subr.mxu0 0.0
  %1555 = vmatpush1.msra.mxu0 %v31
  %1556 = vmatprep.subr.mxu0 0.0
  %1557 = vmatpush2.msra.mxu0 0.0
  %1558 = vmatprep.subr.mxu0 0.0
  %1559 = vmatpush2.msra.mxu0 0.0
  %1560 = vmatprep.subr.mxu0 0.0
  %1561 = vmatpush2.msra.mxu0 0.0
  %1562 = vmatprep.subr.mxu0 0.0
  %1563 = vmatpush2.msra.mxu0 0.0
  %1564 = vmatprep.subr.mxu0 0.0
  %1565 = vmatpush2.msra.mxu0 0.0
  %1566 = vmatprep.subr.mxu0 0.0
  %1567 = vmatpush2.msra.mxu0 0.0
  %1568 = vmatprep.subr.mxu0 0.0
  %1569 = vmatpush2.msra.mxu0 0.0
  %1570 = vmatprep.subr.mxu0 0.0
  %1571 = vmatpush2.msra.mxu0 0.0
  %1572 = vmatprep.subr.mxu0 0.0
  %1573 = vmatpush2.msra.mxu0 0.0
  %1574 = vmatprep.subr.mxu0 0.0
  %1575 = vmatpush2.msra.mxu0 0.0
  %1576 = vmatprep.subr.mxu0 0.0
  %1577 = vmatpush2.msra.mxu0 0.0
  %1578 = vmatprep.subr.mxu0 0.0
  %1579 = vmatpush2.msra.mxu0 0.0
  %1580 = vmatprep.subr.mxu0 0.0
  %1581 = vmatpush2.msra.mxu0 0.0
  %1582 = vmatprep.subr.mxu0 0.0
  %1583 = vmatpush2.msra.mxu0 0.0
  %1584 = vmatprep.subr.mxu0 0.0
  %1585 = vmatpush2.msra.mxu0 0.0
  %1586 = vmatprep.subr.mxu0 0.0
  %1587 = vmatpush2.msra.mxu0 0.0
  %1588 = vmatprep.mubr.f32.mxu0 0.0
  %1589 = vmatmul.mubr.f32.gmra.mxu0 %v1522
  %v1590 = vpop.f32.mrf.mxu0
  %v1591 = vadd.f32 0.0, %v1590
  %v1592 = vpop.f32.mrf.mxu0
  %1593 = vdwg.mxu0
  %v1594 = vadd.f32 %v190, %v1591
  %v1595 = vxor.u32 %v1594, 2147483648
  %v1596 = vmul.f32 %v1595, 1.442695
  %v1597 = vpow.pop %v1596
  %v1598 = vadd.f32 %v1597, 1.0
  %v1599 = vrcp.pop %v1598
  %v1600 = vmul.f32 1.0, %v1599
  %v1601 = vtanh.pop %v1594
  %v1602 = vmul.f32 %v1600, %v1408
  %1604 = vrot.lane.b32.xlu0 %v1601, 96
  %v1605 = vpop.permute.xlu0 %1604
  %v1607 = vmul.f32 %v1600, %v1605
  %1609 = vrot.lane.b32.xlu0 %v1607, 16
  %v1610 = vpop.permute.xlu0 %1609
  %v1612 = vadd.f32 %v1602, %v1610
  %v1613 = vtanh.pop %v1612
  %1615 = vrot.lane.b32.xlu0 %v1613, 32
  %v1616 = vpop.permute.xlu0 %1615
  %v1618 = vmul.f32 %v1600, %v1616
  %v1619 = vsel %vm192, %v1514, 0
  %1621 = vmatprep.subr.mxu0 0.0
  %1622 = vmatpush1.msra.mxu0 0.0
  %1623 = vmatprep.subr.mxu0 0.0
  %1624 = vmatpush1.msra.mxu0 0.0
  %1625 = vmatprep.subr.mxu0 0.0
  %1626 = vmatpush1.msra.mxu0 0.0
  %1627 = vmatprep.subr.mxu0 0.0
  %1628 = vmatpush1.msra.mxu0 0.0
  %1629 = vmatprep.subr.mxu0 0.0
  %1630 = vmatpush1.msra.mxu0 0.0
  %1631 = vmatprep.subr.mxu0 0.0
  %1632 = vmatpush1.msra.mxu0 0.0
  %1633 = vmatprep.subr.mxu0 0.0
  %1634 = vmatpush1.msra.mxu0 0.0
  %1635 = vmatprep.subr.mxu0 0.0
  %1636 = vmatpush1.msra.mxu0 0.0
  %1637 = vmatprep.subr.mxu0 0.0
  %1638 = vmatpush1.msra.mxu0 0.0
  %1639 = vmatprep.subr.mxu0 0.0
  %1640 = vmatpush1.msra.mxu0 0.0
  %1641 = vmatprep.subr.mxu0 0.0
  %1642 = vmatpush1.msra.mxu0 0.0
  %1643 = vmatprep.subr.mxu0 0.0
  %1644 = vmatpush1.msra.mxu0 0.0
  %1645 = vmatprep.subr.mxu0 0.0
  %1646 = vmatpush1.msra.mxu0 0.0
  %1647 = vmatprep.subr.mxu0 0.0
  %1648 = vmatpush1.msra.mxu0 0.0
  %1649 = vmatprep.subr.mxu0 0.0
  %1650 = vmatpush1.msra.mxu0 %v30
  %1651 = vmatprep.subr.mxu0 0.0
  %1652 = vmatpush1.msra.mxu0 %v29
  %1653 = vmatprep.subr.mxu0 0.0
  %1654 = vmatpush2.msra.mxu0 0.0
  %1655 = vmatprep.subr.mxu0 0.0
  %1656 = vmatpush2.msra.mxu0 0.0
  %1657 = vmatprep.subr.mxu0 0.0
  %1658 = vmatpush2.msra.mxu0 0.0
  %1659 = vmatprep.subr.mxu0 0.0
  %1660 = vmatpush2.msra.mxu0 0.0
  %1661 = vmatprep.subr.mxu0 0.0
  %1662 = vmatpush2.msra.mxu0 0.0
  %1663 = vmatprep.subr.mxu0 0.0
  %1664 = vmatpush2.msra.mxu0 0.0
  %1665 = vmatprep.subr.mxu0 0.0
  %1666 = vmatpush2.msra.mxu0 0.0
  %1667 = vmatprep.subr.mxu0 0.0
  %1668 = vmatpush2.msra.mxu0 0.0
  %1669 = vmatprep.subr.mxu0 0.0
  %1670 = vmatpush2.msra.mxu0 0.0
  %1671 = vmatprep.subr.mxu0 0.0
  %1672 = vmatpush2.msra.mxu0 0.0
  %1673 = vmatprep.subr.mxu0 0.0
  %1674 = vmatpush2.msra.mxu0 0.0
  %1675 = vmatprep.subr.mxu0 0.0
  %1676 = vmatpush2.msra.mxu0 0.0
  %1677 = vmatprep.subr.mxu0 0.0
  %1678 = vmatpush2.msra.mxu0 0.0
  %1679 = vmatprep.subr.mxu0 0.0
  %1680 = vmatpush2.msra.mxu0 0.0
  %1681 = vmatprep.subr.mxu0 0.0
  %1682 = vmatpush2.msra.mxu0 0.0
  %1683 = vmatprep.subr.mxu0 0.0
  %1684 = vmatpush2.msra.mxu0 0.0
  %1685 = vmatprep.mubr.f32.mxu0 0.0
  %1686 = vmatmul.mubr.f32.gmra.mxu0 %v1619
  %v1687 = vpop.f32.mrf.mxu0
  %v1688 = vadd.f32 0.0, %v1687
  %v1689 = vpop.f32.mrf.mxu0
  %1690 = vdwg.mxu0
  %v1691 = vadd.f32 %v182, %v1688
  %v1692 = vxor.u32 %v1691, 2147483648
  %v1693 = vmul.f32 %v1692, 1.442695
  %v1694 = vpow.pop %v1693
  %v1695 = vadd.f32 %v1694, 1.0
  %v1696 = vrcp.pop %v1695
  %v1697 = vmul.f32 1.0, %v1696
  %v1698 = vtanh.pop %v1691
  %v1699 = vmul.f32 %v1697, %v1505
  %1701 = vrot.lane.b32.xlu0 %v1698, 96
  %v1702 = vpop.permute.xlu0 %1701
  %v1704 = vmul.f32 %v1697, %v1702
  %1706 = vrot.lane.b32.xlu0 %v1704, 16
  %v1707 = vpop.permute.xlu0 %1706
  %v1709 = vadd.f32 %v1699, %v1707
  %v1710 = vtanh.pop %v1709
  %1712 = vrot.lane.b32.xlu0 %v1710, 32
  %v1713 = vpop.permute.xlu0 %1712
  %v1715 = vmul.f32 %v1697, %v1713
  %1717 = vrot.lane.b32.xlu0 %v1715, 80
  %v1718 = vpop.permute.xlu0 %1717
  %1721 = vrot.lane.b32.xlu0 %v1618, 96
  %v1722 = vpop.permute.xlu0 %1721
  %v1724 = vsel %vm192, %v1718, %v1722
  %v1726 = vsel %vm296, %v1724, 0
  %1728 = vmatprep.subr.mxu0 0.0
  %1729 = vmatpush1.msra.mxu0 0.0
  %1730 = vmatprep.subr.mxu0 0.0
  %1731 = vmatpush1.msra.mxu0 0.0
  %1732 = vmatprep.subr.mxu0 0.0
  %1733 = vmatpush1.msra.mxu0 0.0
  %1734 = vmatprep.subr.mxu0 0.0
  %1735 = vmatpush1.msra.mxu0 0.0
  %1736 = vmatprep.subr.mxu0 0.0
  %1737 = vmatpush1.msra.mxu0 0.0
  %1738 = vmatprep.subr.mxu0 0.0
  %1739 = vmatpush1.msra.mxu0 0.0
  %1740 = vmatprep.subr.mxu0 0.0
  %1741 = vmatpush1.msra.mxu0 0.0
  %1742 = vmatprep.subr.mxu0 0.0
  %1743 = vmatpush1.msra.mxu0 0.0
  %1744 = vmatprep.subr.mxu0 0.0
  %1745 = vmatpush1.msra.mxu0 0.0
  %1746 = vmatprep.subr.mxu0 0.0
  %1747 = vmatpush1.msra.mxu0 0.0
  %1748 = vmatprep.subr.mxu0 0.0
  %1749 = vmatpush1.msra.mxu0 0.0
  %1750 = vmatprep.subr.mxu0 0.0
  %1751 = vmatpush1.msra.mxu0 0.0
  %1752 = vmatprep.subr.mxu0 0.0
  %1753 = vmatpush1.msra.mxu0 %v34
  %1754 = vmatprep.subr.mxu0 0.0
  %1755 = vmatpush1.msra.mxu0 %v33
  %1756 = vmatprep.subr.mxu0 0.0
  %1757 = vmatpush1.msra.mxu0 %v32
  %1758 = vmatprep.subr.mxu0 0.0
  %1759 = vmatpush1.msra.mxu0 %v31
  %1760 = vmatprep.subr.mxu0 0.0
  %1761 = vmatpush2.msra.mxu0 0.0
  %1762 = vmatprep.subr.mxu0 0.0
  %1763 = vmatpush2.msra.mxu0 0.0
  %1764 = vmatprep.subr.mxu0 0.0
  %1765 = vmatpush2.msra.mxu0 0.0
  %1766 = vmatprep.subr.mxu0 0.0
  %1767 = vmatpush2.msra.mxu0 0.0
  %1768 = vmatprep.subr.mxu0 0.0
  %1769 = vmatpush2.msra.mxu0 0.0
  %1770 = vmatprep.subr.mxu0 0.0
  %1771 = vmatpush2.msra.mxu0 0.0
  %1772 = vmatprep.subr.mxu0 0.0
  %1773 = vmatpush2.msra.mxu0 0.0
  %1774 = vmatprep.subr.mxu0 0.0
  %1775 = vmatpush2.msra.mxu0 0.0
  %1776 = vmatprep.subr.mxu0 0.0
  %1777 = vmatpush2.msra.mxu0 0.0
  %1778 = vmatprep.subr.mxu0 0.0
  %1779 = vmatpush2.msra.mxu0 0.0
  %1780 = vmatprep.subr.mxu0 0.0
  %1781 = vmatpush2.msra.mxu0 0.0
  %1782 = vmatprep.subr.mxu0 0.0
  %1783 = vmatpush2.msra.mxu0 0.0
  %1784 = vmatprep.subr.mxu0 0.0
  %1785 = vmatpush2.msra.mxu0 0.0
  %1786 = vmatprep.subr.mxu0 0.0
  %1787 = vmatpush2.msra.mxu0 0.0
  %1788 = vmatprep.subr.mxu0 0.0
  %1789 = vmatpush2.msra.mxu0 0.0
  %1790 = vmatprep.subr.mxu0 0.0
  %1791 = vmatpush2.msra.mxu0 0.0
  %1792 = vmatprep.mubr.f32.mxu0 0.0
  %1793 = vmatmul.mubr.f32.gmra.mxu0 %v1726
  %v1794 = vpop.f32.mrf.mxu0
  %v1795 = vadd.f32 0.0, %v1794
  %v1796 = vpop.f32.mrf.mxu0
  %1797 = vdwg.mxu0
  %v1798 = vadd.f32 %v190, %v1795
  %v1799 = vxor.u32 %v1798, 2147483648
  %v1800 = vmul.f32 %v1799, 1.442695
  %v1801 = vpow.pop %v1800
  %v1802 = vadd.f32 %v1801, 1.0
  %v1803 = vrcp.pop %v1802
  %v1804 = vmul.f32 1.0, %v1803
  %v1805 = vtanh.pop %v1798
  %v1806 = vmul.f32 %v1804, %v1612
  %1808 = vrot.lane.b32.xlu0 %v1805, 96
  %v1809 = vpop.permute.xlu0 %1808
  %v1811 = vmul.f32 %v1804, %v1809
  %1813 = vrot.lane.b32.xlu0 %v1811, 16
  %v1814 = vpop.permute.xlu0 %1813
  %v1816 = vadd.f32 %v1806, %v1814
  %v1817 = vtanh.pop %v1816
  %1819 = vrot.lane.b32.xlu0 %v1817, 32
  %v1820 = vpop.permute.xlu0 %1819
  %v1822 = vmul.f32 %v1804, %v1820
  %v1823 = vld [vmem:[%s6] sm:$0xff]
  %v1824 = vld [vmem:[%s6 + $0x8] sm:$0xff]
  %v1825 = vld [vmem:[%s7] sm:$0x1]
  %v1827 = vlaneseq
  %v1828 = vshrl.u32 %v1827, 7
  %v1829 = vsub.s32 0, %v1828
  %v1830 = vrot.slane %v1825, %v1829
  %1833 = vrot.lane.b32.xlu0 %v394, 80
  %v1834 = vpop.permute.xlu0 %1833
  %1835 = vrot.lane.b32.xlu0 %v598, 80
  %v1836 = vpop.permute.xlu0 %1835
  %1837 = vrot.lane.b32.xlu0 %v802, 80
  %v1838 = vpop.permute.xlu0 %1837
  %1839 = vrot.lane.b32.xlu0 %v1006, 80
  %v1840 = vpop.permute.xlu0 %1839
  %1841 = vrot.lane.b32.xlu0 %v1210, 80
  %v1842 = vpop.permute.xlu0 %1841
  %1843 = vrot.lane.b32.xlu0 %v1414, 80
  %v1844 = vpop.permute.xlu0 %1843
  %1845 = vrot.lane.b32.xlu0 %v1618, 80
  %v1846 = vpop.permute.xlu0 %1845
  %1847 = vrot.lane.b32.xlu0 %v1822, 80
  %v1848 = vpop.permute.xlu0 %1847
  %v1849 = vsel %vm192, %v1834, 0
  %v1851 = vsel %vm192, %v1836, 0
  %v1853 = vsel %vm192, %v1838, 0
  %v1855 = vsel %vm192, %v1840, 0
  %v1857 = vsel %vm192, %v1842, 0
  %v1859 = vsel %vm192, %v1844, 0
  %v1861 = vsel %vm192, %v1846, 0
  %v1863 = vsel %vm192, %v1848, 0
  %1865 = vmatprep.subr.mxu0 0.0
  %1866 = vmatpush1.msra.mxu0 0.0
  %1867 = vmatprep.subr.mxu0 0.0
  %1868 = vmatpush1.msra.mxu0 0.0
  %1869 = vmatprep.subr.mxu0 0.0
  %1870 = vmatpush1.msra.mxu0 0.0
  %1871 = vmatprep.subr.mxu0 0.0
  %1872 = vmatpush1.msra.mxu0 0.0
  %1873 = vmatprep.subr.mxu0 0.0
  %1874 = vmatpush1.msra.mxu0 0.0
  %1875 = vmatprep.subr.mxu0 0.0
  %1876 = vmatpush1.msra.mxu0 0.0
  %1877 = vmatprep.subr.mxu0 0.0
  %1878 = vmatpush1.msra.mxu0 0.0
  %1879 = vmatprep.subr.mxu0 0.0
  %1880 = vmatpush1.msra.mxu0 0.0
  %1881 = vmatprep.subr.mxu0 0.0
  %1882 = vmatpush1.msra.mxu0 0.0
  %1883 = vmatprep.subr.mxu0 0.0
  %1884 = vmatpush1.msra.mxu0 0.0
  %1885 = vmatprep.subr.mxu0 0.0
  %1886 = vmatpush1.msra.mxu0 0.0
  %1887 = vmatprep.subr.mxu0 0.0
  %1888 = vmatpush1.msra.mxu0 0.0
  %1889 = vmatprep.subr.mxu0 0.0
  %1890 = vmatpush1.msra.mxu0 0.0
  %1891 = vmatprep.subr.mxu0 0.0
  %1892 = vmatpush1.msra.mxu0 0.0
  %1893 = vmatprep.subr.mxu0 0.0
  %1894 = vmatpush1.msra.mxu0 %v1824
  %1895 = vmatprep.subr.mxu0 0.0
  %1896 = vmatpush1.msra.mxu0 %v1823
  %1897 = vmatprep.subr.mxu0 0.0
  %1898 = vmatpush2.msra.mxu0 0.0
  %1899 = vmatprep.subr.mxu0 0.0
  %1900 = vmatpush2.msra.mxu0 0.0
  %1901 = vmatprep.subr.mxu0 0.0
  %1902 = vmatpush2.msra.mxu0 0.0
  %1903 = vmatprep.subr.mxu0 0.0
  %1904 = vmatpush2.msra.mxu0 0.0
  %1905 = vmatprep.subr.mxu0 0.0
  %1906 = vmatpush2.msra.mxu0 0.0
  %1907 = vmatprep.subr.mxu0 0.0
  %1908 = vmatpush2.msra.mxu0 0.0
  %1909 = vmatprep.subr.mxu0 0.0
  %1910 = vmatpush2.msra.mxu0 0.0
  %1911 = vmatprep.subr.mxu0 0.0
  %1912 = vmatpush2.msra.mxu0 0.0
  %1913 = vmatprep.subr.mxu0 0.0
  %1914 = vmatpush2.msra.mxu0 0.0
  %1915 = vmatprep.subr.mxu0 0.0
  %1916 = vmatpush2.msra.mxu0 0.0
  %1917 = vmatprep.subr.mxu0 0.0
  %1918 = vmatpush2.msra.mxu0 0.0
  %1919 = vmatprep.subr.mxu0 0.0
  %1920 = vmatpush2.msra.mxu0 0.0
  %1921 = vmatprep.subr.mxu0 0.0
  %1922 = vmatpush2.msra.mxu0 0.0
  %1923 = vmatprep.subr.mxu0 0.0
  %1924 = vmatpush2.msra.mxu0 0.0
  %1925 = vmatprep.subr.mxu0 0.0
  %1926 = vmatpush2.msra.mxu0 0.0
  %1927 = vmatprep.subr.mxu0 0.0
  %1928 = vmatpush2.msra.mxu0 0.0
  %1929 = vmatprep.mubr.f32.mxu0 0.0
  %1930 = vmatmul.mubr.f32.gmra.mxu0 %v1849
  %v1931 = vpop.f32.mrf.mxu0
  %v1932 = vadd.f32 %v1830, %v1931
  %v1933 = vpop.f32.mrf.mxu0
  %1934 = vmatprep.mubr.f32.mxu0 0.0
  %1935 = vmatmul.mubr.f32.gmra.mxu0 %v1851
  %v1936 = vpop.f32.mrf.mxu0
  %v1937 = vadd.f32 %v1830, %v1936
  %v1938 = vpop.f32.mrf.mxu0
  %1939 = vmatprep.mubr.f32.mxu0 0.0
  %1940 = vmatmul.mubr.f32.gmra.mxu0 %v1853
  %v1941 = vpop.f32.mrf.mxu0
  %v1942 = vadd.f32 %v1830, %v1941
  %v1943 = vpop.f32.mrf.mxu0
  %1944 = vmatprep.mubr.f32.mxu0 0.0
  %1945 = vmatmul.mubr.f32.gmra.mxu0 %v1855
  %v1946 = vpop.f32.mrf.mxu0
  %v1947 = vadd.f32 %v1830, %v1946
  %v1948 = vpop.f32.mrf.mxu0
  %1949 = vmatprep.mubr.f32.mxu0 0.0
  %1950 = vmatmul.mubr.f32.gmra.mxu0 %v1857
  %v1951 = vpop.f32.mrf.mxu0
  %v1952 = vadd.f32 %v1830, %v1951
  %v1953 = vpop.f32.mrf.mxu0
  %1954 = vmatprep.mubr.f32.mxu0 0.0
  %1955 = vmatmul.mubr.f32.gmra.mxu0 %v1859
  %v1956 = vpop.f32.mrf.mxu0
  %v1957 = vadd.f32 %v1830, %v1956
  %v1958 = vpop.f32.mrf.mxu0
  %1959 = vmatprep.mubr.f32.mxu0 0.0
  %1960 = vmatmul.mubr.f32.gmra.mxu0 %v1861
  %v1961 = vpop.f32.mrf.mxu0
  %v1962 = vadd.f32 %v1830, %v1961
  %v1963 = vpop.f32.mrf.mxu0
  %1964 = vmatprep.mubr.f32.mxu0 0.0
  %1965 = vmatmul.mubr.f32.gmra.mxu0 %v1863
  %v1966 = vpop.f32.mrf.mxu0
  %v1967 = vadd.f32 %v1830, %v1966
  %v1968 = vpop.f32.mrf.mxu0
  %1969 = vdwg.mxu0
  %vm1970 = vcmask 23552
  %1971 = vst.msk [vmem:[%s8] sm:$0xff] %vm1970, %v1932
  %1972 = vst.msk [vmem:[%s8 + $0x8] sm:$0xff] %vm1970, %v1937
  %1973 = vst.msk [vmem:[%s8 + $0x10] sm:$0xff] %vm1970, %v1942
  %1974 = vst.msk [vmem:[%s8 + $0x18] sm:$0xff] %vm1970, %v1947
  %1975 = vst.msk [vmem:[%s8 + $0x20] sm:$0xff] %vm1970, %v1952
  %1976 = vst.msk [vmem:[%s8 + $0x28] sm:$0xff] %vm1970, %v1957
  %1977 = vst.msk [vmem:[%s8 + $0x30] sm:$0xff] %vm1970, %v1962
  %1978 = vst.msk [vmem:[%s8 + $0x38] sm:$0xff] %vm1970, %v1967
  // Predicated region
  $region34: #{tpu_custom_call.1} parent=0 // pred_check
    _
  $region35: #{tpu_custom_call.1} parent=0 // pred_check_branch
    %1980 = sbr.rel (0) target = $region37
  $region36: #{tpu_custom_call.1} parent=0 // pred_region
    _
  $region37: #{tpu_custom_call.1} parent=0 // pred_fallthru
    _
  // Predicated region
  $region38: #{tpu_custom_call.1} parent=0 // pred_check
    _
  $region39: #{tpu_custom_call.1} parent=0 // pred_check_branch
    %1982 = sbr.rel (0) target = $region41
  $region40: #{tpu_custom_call.1} parent=0 // pred_region
    _
  $region41: #{tpu_custom_call.1} parent=0 // pred_fallthru
    _

</llo_original>
